<compile_context>
chip_gen: v6e
topology: v6e:2x2x1
jax: 0.10.0
libtpu: 0.0.40
codegen_flags: <defaults>
</compile_context>

<pallas_src>
import functools
import math

import jax
import jax.numpy as jnp
from jax.experimental import pallas as pl
from jax.experimental.pallas import tpu as pltpu

_DEF = jax.lax.Precision.DEFAULT       # single-pass native bf16 MXU
_LOG2 = math.log(2.0)


def _softplus(x):
    # numerically-stable softplus in f32; VPU/EUP only
    return jnp.maximum(x, 0.0) + jnp.log1p(jnp.exp(-jnp.abs(x)))


def gcn_infomax_kernel(x_ref, adjh_ref, pool_ref,
                       w1_ref, b1_ref, w2_ref, b2_ref,
                       wg03_ref, wg1_ref, wg2_ref, bg_ref,
                       wl03_ref, wl1_ref, wl2_ref, bl_ref,
                       loss_ref, *, num_layers):
    N, D = x_ref.shape
    G = pool_ref.shape[0]
    E = num_layers * D
    bf16 = jnp.bfloat16

    h = x_ref[...]                      # (N, D) bf16 node features
    adjh = adjh_ref[...]                # (N, N) bf16 exact (I + A)[dst, src]
    pool = pool_ref[...]                # (G, N) bf16 exact 0/1 == pos_mask.T

    # Running accumulators for the fused first-layer+shortcut head dots.
    #   zl == M @ [wl0 | wl3]          (local head input, lane-dense 2E)
    #   zg == (pool @ M) @ [wg0 | wg3] (global head input)
    # Built layer by layer so the concatenated node-embedding matrix M is
    # never materialized (no lane-offset writes / masked stores at all).
    zl = jnp.zeros((N, 2 * E), jnp.float32)
    zg = jnp.zeros((G, 2 * E), jnp.float32)

    for i in range(num_layers):
        # GINConv (eps = 0): MLP((I + A) @ x), MLP = Linear->ReLU->Linear,
        # followed by the Encoder's outer ReLU.  Single-pass bf16 MXU with
        # f32 accumulation everywhere.
        agg = jnp.dot(adjh, h, preferred_element_type=jnp.float32,
                      precision=_DEF)                            # (N, D) f32
        t = jnp.maximum(
            jnp.dot(agg.astype(bf16), w1_ref[i],
                    preferred_element_type=jnp.float32, precision=_DEF)
            + b1_ref[i], 0.0)
        t = jnp.dot(t.astype(bf16), w2_ref[i],
                    preferred_element_type=jnp.float32, precision=_DEF) + b2_ref[i]
        h = jnp.maximum(t, 0.0).astype(bf16)                     # (N, D) bf16

        # Distribute the feature concat over layers: M[:, i*D:(i+1)*D] == h_i.
        zl = zl + jnp.dot(h, wl03_ref[i],
                          preferred_element_type=jnp.float32, precision=_DEF)
        ph = jnp.dot(pool, h, preferred_element_type=jnp.float32,
                     precision=_DEF)                             # (G, D) slice of y
        zg = zg + jnp.dot(ph.astype(bf16), wg03_ref[i],
                          preferred_element_type=jnp.float32, precision=_DEF)

    # FF heads: Linear->ReLU x3 block + linear shortcut.  The first Linear and
    # the shortcut were already consumed via the fused (L, D, 2E) weight:
    # u[:, :E] == z @ w0 and u[:, E:] == z @ w3 (lane-group aligned slices).
    def head_tail(u, w1_r, w2_r, b_r):
        t = jnp.maximum(u[:, :E] + b_r[0], 0.0)
        t = jnp.maximum(
            jnp.dot(t.astype(bf16), w1_r[...],
                    preferred_element_type=jnp.float32, precision=_DEF)
            + b_r[1], 0.0)
        t = jnp.maximum(
            jnp.dot(t.astype(bf16), w2_r[...],
                    preferred_element_type=jnp.float32, precision=_DEF)
            + b_r[2], 0.0)
        return t + u[:, E:] + b_r[3]

    g_enc = head_tail(zg, wg1_ref, wg2_ref, bg_ref)              # (G, E)
    l_enc = head_tail(zl, wl1_ref, wl2_ref, bl_ref)              # (N, E)

    # ---- JSD local/global loss in the lane-dense (G, N) layout --------------
    # res_t = (l_enc @ g_enc.T).T == g_enc @ l_enc.T ; pool (G, N) == pos_mask.T
    res_t = jax.lax.dot_general(
        g_enc.astype(bf16), l_enc.astype(bf16), (((1,), (1,)), ((), ())),
        preferred_element_type=jnp.float32, precision=_DEF)      # (G, N)

    pos_t = pool.astype(jnp.float32)
    p = res_t * pos_t
    q = res_t - p                                                # == res_t * neg_mask
    e_pos = (_LOG2 - _softplus(-p)).sum() * (1.0 / N)
    e_neg = (_softplus(-q) + q - _LOG2).sum() * (1.0 / (N * (G - 1)))

    loss_ref[0] = e_neg - e_pos                                  # scalar -> SMEM


def gcn_infomax_loss(x, adj, pool, params):
    """x: (N, D) f32, adj: (N, N) f32 A[dst, src], pool: (G, N) f32 0/1."""
    N, D = x.shape
    G = pool.shape[0]
    L = params["w1"].shape[0]
    E = L * D
    bf16 = jnp.bfloat16

    # Host-side prep: bf16 casts, fold (1+eps)*x + A@x into (I+A)@x, fuse the
    # FF-head first-layer and shortcut weights into one (L, D, 2E) tensor.
    x_b = x.astype(bf16)
    adjh = (adj + jnp.eye(N, dtype=adj.dtype)).astype(bf16)   # exact small ints
    pool_b = pool.astype(bf16)                                # exact 0/1

    w1 = params["w1"].astype(bf16)
    w2 = params["w2"].astype(bf16)
    b1, b2 = params["b1"], params["b2"]                       # f32 biases

    def fuse_head(w):
        w03 = jnp.concatenate([w[0], w[3]], axis=1)           # (E, 2E)
        return (w03.reshape(L, D, 2 * E).astype(bf16),
                w[1].astype(bf16), w[2].astype(bf16))

    wg03, wg1, wg2 = fuse_head(params["wg"])
    wl03, wl1, wl2 = fuse_head(params["wl"])
    bg, bl = params["bg"], params["bl"]

    inputs = (x_b, adjh, pool_b, w1, b1, w2, b2,
              wg03, wg1, wg2, bg, wl03, wl1, wl2, bl)

    flops = (2 * L * N * N * D          # (I+A) @ h per layer
             + 4 * L * N * D * D        # GIN MLP dots
             + 4 * N * E * E            # distributed local fused first+shortcut dot
             + 2 * G * N * E            # distributed pooling (pool @ h_i)
             + 4 * G * E * E            # distributed global fused first+shortcut dot
             + 4 * N * E * E            # local head tail (two ExE dots)
             + 4 * G * E * E            # global head tail
             + 2 * G * N * E)           # discriminator dot
    transcendentals = 4 * N * G         # exp + log1p for p and q
    bytes_accessed = sum(int(a.size) * a.dtype.itemsize for a in inputs) + 4

    vmem = pltpu.MemorySpace.VMEM
    loss = pl.pallas_call(
        functools.partial(gcn_infomax_kernel, num_layers=L),
        out_shape=jax.ShapeDtypeStruct((1,), jnp.float32),
        in_specs=[pl.BlockSpec(memory_space=vmem) for _ in inputs],
        out_specs=pl.BlockSpec(memory_space=pltpu.MemorySpace.SMEM),
        compiler_params=pltpu.CompilerParams(vmem_limit_bytes=32 * 1024 * 1024),
        cost_estimate=pl.CostEstimate(flops=int(flops),
                                      transcendentals=int(transcendentals),
                                      bytes_accessed=int(bytes_accessed)),
    )(*inputs)
    return loss[0]


# --------------------------- plain-JAX reference ----------------------------
def reference_loss(x, adj, pool, params):
    """Full-precision f32 reference with the original (N, G) formulation."""
    HI = jax.lax.Precision.HIGHEST
    L = params["w1"].shape[0]
    h = x
    xs = []
    for i in range(L):
        agg = h + jnp.dot(adj, h, precision=HI)
        t = jax.nn.relu(jnp.dot(agg, params["w1"][i], precision=HI) + params["b1"][i])
        t = jnp.dot(t, params["w2"][i], precision=HI) + params["b2"][i]
        h = jax.nn.relu(t)
        xs.append(h)
    M = jnp.concatenate(xs, axis=1)
    y = jnp.dot(pool, M, precision=HI)

    def ff(z, w, b):
        t = jax.nn.relu(jnp.dot(z, w[0], precision=HI) + b[0])
        t = jax.nn.relu(jnp.dot(t, w[1], precision=HI) + b[1])
        t = jax.nn.relu(jnp.dot(t, w[2], precision=HI) + b[2])
        return t + jnp.dot(z, w[3], precision=HI) + b[3]

    g_enc = ff(y, params["wg"], params["bg"])
    l_enc = ff(M, params["wl"], params["bl"])
    res = jnp.dot(l_enc, g_enc.T, precision=HI)        # (N, G)
    pos = pool.T
    neg = 1.0 - pos
    log2 = jnp.log(2.0)
    N, G = res.shape
    e_pos = (log2 - jax.nn.softplus(-(res * pos))).sum() / N
    e_neg = (jax.nn.softplus(-(res * neg)) + res * neg - log2).sum() / (N * (G - 1))
    return e_neg - e_pos


# --------------------------- parameter init ----------------------------------
def init_params(key, D, L):
    """Xavier-uniform weights, zero biases (matches init_emb)."""
    E = D * L
    ks = jax.random.split(key, 2 * L + 8)

    def xavier(k, fan_in, fan_out):
        lim = (6.0 / (fan_in + fan_out)) ** 0.5
        return jax.random.uniform(k, (fan_in, fan_out), jnp.float32, -lim, lim)

    # GIN MLPs (dataset_num_features == hidden_dim so every layer is (D, D))
    w1 = jnp.stack([xavier(ks[i], D, D) for i in range(L)])
    w2 = jnp.stack([xavier(ks[L + i], D, D) for i in range(L)])
    b1 = jnp.zeros((L, 1, D), jnp.float32)
    b2 = jnp.zeros((L, 1, D), jnp.float32)
    # FF heads: [lin1, lin2, lin3, shortcut]
    wg = jnp.stack([xavier(ks[2 * L + i], E, E) for i in range(4)])
    wl = jnp.stack([xavier(ks[2 * L + 4 + i], E, E) for i in range(4)])
    bg = jnp.zeros((4, 1, E), jnp.float32)
    bl = jnp.zeros((4, 1, E), jnp.float32)
    return dict(w1=w1, b1=b1, w2=w2, b2=b2, wg=wg, bg=bg, wl=wl, bl=bl)


if __name__ == "__main__":
    N, G, D, L = 32, 4, 32, 4          # nodes, graphs, hidden_dim, num_gc_layers
    key = jax.random.PRNGKey(0)
    k = jax.random.split(key, 8)

    # node features (dataset_num_features == hidden_dim == D)
    x = jax.random.normal(k[0], (N, D), jnp.float32)

    # random edge_index -> dense adjacency A[dst, src] (GIN message direction)
    num_edges = 96
    src = jax.random.randint(k[1], (num_edges,), 0, N)
    dst = jax.random.randint(k[2], (num_edges,), 0, N)
    adj = jnp.zeros((N, N), jnp.float32).at[dst, src].add(1.0)

    # batch assignment: N // G nodes per graph; pool (G, N) == pos_mask.T
    batch = jnp.repeat(jnp.arange(G), N // G)
    pool = (jnp.arange(G)[:, None] == batch[None, :]).astype(jnp.float32)

    params = init_params(k[3], D, L)

    loss = gcn_infomax_loss(x, adj, pool, params)
    jax.block_until_ready(loss)

    ref = reference_loss(x, adj, pool, params)
    rel_err = abs(float(loss) - float(ref)) / max(abs(float(ref)), 1e-3)
    assert jnp.isfinite(loss), "kernel produced non-finite loss"
    assert rel_err < 5e-2, f"mismatch: kernel={float(loss)} ref={float(ref)} rel={rel_err}"
    print("KERNEL_OK")
</pallas_src>

<mosaic_0001>
module attributes {stable_mosaic.version = 11 : i64} {
  func.func @gcn_infomax_kernel(%arg0: memref<32x32xbf16, #tpu.memory_space<vmem>>, %arg1: memref<32x32xbf16, #tpu.memory_space<vmem>>, %arg2: memref<4x32xbf16, #tpu.memory_space<vmem>>, %arg3: memref<4x32x32xbf16, #tpu.memory_space<vmem>>, %arg4: memref<4x1x32xf32, #tpu.memory_space<vmem>>, %arg5: memref<4x32x32xbf16, #tpu.memory_space<vmem>>, %arg6: memref<4x1x32xf32, #tpu.memory_space<vmem>>, %arg7: memref<4x32x256xbf16, #tpu.memory_space<vmem>>, %arg8: memref<128x128xbf16, #tpu.memory_space<vmem>>, %arg9: memref<128x128xbf16, #tpu.memory_space<vmem>>, %arg10: memref<4x1x128xf32, #tpu.memory_space<vmem>>, %arg11: memref<4x32x256xbf16, #tpu.memory_space<vmem>>, %arg12: memref<128x128xbf16, #tpu.memory_space<vmem>>, %arg13: memref<128x128xbf16, #tpu.memory_space<vmem>>, %arg14: memref<4x1x128xf32, #tpu.memory_space<vmem>>, %arg15: memref<1xf32, #tpu.memory_space<smem>>) attributes {dimension_semantics = [], scalar_prefetch = 0 : i64, scratch_operands = 0 : i64, tpu.core_type = #tpu.core_type<tc>} {
    %c0 = arith.constant 0 : index
    %c0_0 = arith.constant 0 : index
    %0 = vector.load %arg0[%c0, %c0_0] : memref<32x32xbf16, #tpu.memory_space<vmem>>, vector<32x32xbf16>
    %c0_1 = arith.constant 0 : index
    %c0_2 = arith.constant 0 : index
    %1 = vector.load %arg1[%c0_1, %c0_2] : memref<32x32xbf16, #tpu.memory_space<vmem>>, vector<32x32xbf16>
    %c0_3 = arith.constant 0 : index
    %c0_4 = arith.constant 0 : index
    %2 = vector.load %arg2[%c0_3, %c0_4] : memref<4x32xbf16, #tpu.memory_space<vmem>>, vector<4x32xbf16>
    %cst = arith.constant 0.000000e+00 : f32
    %3 = vector.broadcast %cst : f32 to vector<32x256xf32>
    %cst_5 = arith.constant 0.000000e+00 : f32
    %4 = vector.broadcast %cst_5 : f32 to vector<4x256xf32>
    %cst_6 = arith.constant dense<0.000000e+00> : vector<32x32xf32>
    %5 = tpu.matmul %1, %0, %cst_6 {dimension_numbers = #tpu.dot_dimension_numbers<[1], [0], [0], [1], [0, 0, 1, 1], [], []>} : vector<32x32xbf16>, vector<32x32xbf16>, vector<32x32xf32> -> vector<32x32xf32>
    %6 = arith.truncf %5 : vector<32x32xf32> to vector<32x32xbf16>
    %c0_7 = arith.constant 0 : index
    %c0_8 = arith.constant 0 : index
    %c0_9 = arith.constant 0 : index
    %7 = vector.load %arg3[%c0_7, %c0_8, %c0_9] : memref<4x32x32xbf16, #tpu.memory_space<vmem>>, vector<1x32x32xbf16>
    %8 = vector.shape_cast %7 : vector<1x32x32xbf16> to vector<32x32xbf16>
    %cst_10 = arith.constant dense<0.000000e+00> : vector<32x32xf32>
    %9 = tpu.matmul %6, %8, %cst_10 {dimension_numbers = #tpu.dot_dimension_numbers<[1], [0], [0], [1], [0, 0, 1, 1], [], []>} : vector<32x32xbf16>, vector<32x32xbf16>, vector<32x32xf32> -> vector<32x32xf32>
    %c0_11 = arith.constant 0 : index
    %c0_12 = arith.constant 0 : index
    %c0_13 = arith.constant 0 : index
    %10 = vector.load %arg4[%c0_11, %c0_12, %c0_13] : memref<4x1x32xf32, #tpu.memory_space<vmem>>, vector<1x1x32xf32>
    %11 = vector.shape_cast %10 : vector<1x1x32xf32> to vector<1x32xf32>
    %12 = vector.broadcast %11 : vector<1x32xf32> to vector<32x32xf32>
    %13 = arith.addf %9, %12 : vector<32x32xf32>
    %cst_14 = arith.constant 0.000000e+00 : f32
    %14 = vector.broadcast %cst_14 : f32 to vector<32x32xf32>
    %15 = arith.maximumf %13, %14 : vector<32x32xf32>
    %16 = arith.truncf %15 : vector<32x32xf32> to vector<32x32xbf16>
    %c0_15 = arith.constant 0 : index
    %c0_16 = arith.constant 0 : index
    %c0_17 = arith.constant 0 : index
    %17 = vector.load %arg5[%c0_15, %c0_16, %c0_17] : memref<4x32x32xbf16, #tpu.memory_space<vmem>>, vector<1x32x32xbf16>
    %18 = vector.shape_cast %17 : vector<1x32x32xbf16> to vector<32x32xbf16>
    %cst_18 = arith.constant dense<0.000000e+00> : vector<32x32xf32>
    %19 = tpu.matmul %16, %18, %cst_18 {dimension_numbers = #tpu.dot_dimension_numbers<[1], [0], [0], [1], [0, 0, 1, 1], [], []>} : vector<32x32xbf16>, vector<32x32xbf16>, vector<32x32xf32> -> vector<32x32xf32>
    %c0_19 = arith.constant 0 : index
    %c0_20 = arith.constant 0 : index
    %c0_21 = arith.constant 0 : index
    %20 = vector.load %arg6[%c0_19, %c0_20, %c0_21] : memref<4x1x32xf32, #tpu.memory_space<vmem>>, vector<1x1x32xf32>
    %21 = vector.shape_cast %20 : vector<1x1x32xf32> to vector<1x32xf32>
    %22 = vector.broadcast %21 : vector<1x32xf32> to vector<32x32xf32>
    %23 = arith.addf %19, %22 : vector<32x32xf32>
    %cst_22 = arith.constant 0.000000e+00 : f32
    %24 = vector.broadcast %cst_22 : f32 to vector<32x32xf32>
    %25 = arith.maximumf %23, %24 : vector<32x32xf32>
    %26 = arith.truncf %25 : vector<32x32xf32> to vector<32x32xbf16>
    %c0_23 = arith.constant 0 : index
    %c0_24 = arith.constant 0 : index
    %c0_25 = arith.constant 0 : index
    %27 = vector.load %arg11[%c0_23, %c0_24, %c0_25] : memref<4x32x256xbf16, #tpu.memory_space<vmem>>, vector<1x32x256xbf16>
    %28 = vector.shape_cast %27 : vector<1x32x256xbf16> to vector<32x256xbf16>
    %cst_26 = arith.constant dense<0.000000e+00> : vector<32x256xf32>
    %29 = tpu.matmul %26, %28, %cst_26 {dimension_numbers = #tpu.dot_dimension_numbers<[1], [0], [0], [1], [0, 0, 1, 1], [], []>} : vector<32x32xbf16>, vector<32x256xbf16>, vector<32x256xf32> -> vector<32x256xf32>
    %30 = arith.addf %3, %29 : vector<32x256xf32>
    %cst_27 = arith.constant dense<0.000000e+00> : vector<4x32xf32>
    %31 = tpu.matmul %2, %26, %cst_27 {dimension_numbers = #tpu.dot_dimension_numbers<[1], [0], [0], [1], [0, 0, 1, 1], [], []>} : vector<4x32xbf16>, vector<32x32xbf16>, vector<4x32xf32> -> vector<4x32xf32>
    %32 = arith.truncf %31 : vector<4x32xf32> to vector<4x32xbf16>
    %c0_28 = arith.constant 0 : index
    %c0_29 = arith.constant 0 : index
    %c0_30 = arith.constant 0 : index
    %33 = vector.load %arg7[%c0_28, %c0_29, %c0_30] : memref<4x32x256xbf16, #tpu.memory_space<vmem>>, vector<1x32x256xbf16>
    %34 = vector.shape_cast %33 : vector<1x32x256xbf16> to vector<32x256xbf16>
    %cst_31 = arith.constant dense<0.000000e+00> : vector<4x256xf32>
    %35 = tpu.matmul %32, %34, %cst_31 {dimension_numbers = #tpu.dot_dimension_numbers<[1], [0], [0], [1], [0, 0, 1, 1], [], []>} : vector<4x32xbf16>, vector<32x256xbf16>, vector<4x256xf32> -> vector<4x256xf32>
    %36 = arith.addf %4, %35 : vector<4x256xf32>
    %cst_32 = arith.constant dense<0.000000e+00> : vector<32x32xf32>
    %37 = tpu.matmul %1, %26, %cst_32 {dimension_numbers = #tpu.dot_dimension_numbers<[1], [0], [0], [1], [0, 0, 1, 1], [], []>} : vector<32x32xbf16>, vector<32x32xbf16>, vector<32x32xf32> -> vector<32x32xf32>
    %38 = arith.truncf %37 : vector<32x32xf32> to vector<32x32xbf16>
    %c1 = arith.constant 1 : index
    %c0_33 = arith.constant 0 : index
    %c0_34 = arith.constant 0 : index
    %39 = vector.load %arg3[%c1, %c0_33, %c0_34] : memref<4x32x32xbf16, #tpu.memory_space<vmem>>, vector<1x32x32xbf16>
    %40 = vector.shape_cast %39 : vector<1x32x32xbf16> to vector<32x32xbf16>
    %cst_35 = arith.constant dense<0.000000e+00> : vector<32x32xf32>
    %41 = tpu.matmul %38, %40, %cst_35 {dimension_numbers = #tpu.dot_dimension_numbers<[1], [0], [0], [1], [0, 0, 1, 1], [], []>} : vector<32x32xbf16>, vector<32x32xbf16>, vector<32x32xf32> -> vector<32x32xf32>
    %c1_36 = arith.constant 1 : index
    %c0_37 = arith.constant 0 : index
    %c0_38 = arith.constant 0 : index
    %42 = vector.load %arg4[%c1_36, %c0_37, %c0_38] : memref<4x1x32xf32, #tpu.memory_space<vmem>>, vector<1x1x32xf32>
    %43 = vector.shape_cast %42 : vector<1x1x32xf32> to vector<1x32xf32>
    %44 = vector.broadcast %43 : vector<1x32xf32> to vector<32x32xf32>
    %45 = arith.addf %41, %44 : vector<32x32xf32>
    %cst_39 = arith.constant 0.000000e+00 : f32
    %46 = vector.broadcast %cst_39 : f32 to vector<32x32xf32>
    %47 = arith.maximumf %45, %46 : vector<32x32xf32>
    %48 = arith.truncf %47 : vector<32x32xf32> to vector<32x32xbf16>
    %c1_40 = arith.constant 1 : index
    %c0_41 = arith.constant 0 : index
    %c0_42 = arith.constant 0 : index
    %49 = vector.load %arg5[%c1_40, %c0_41, %c0_42] : memref<4x32x32xbf16, #tpu.memory_space<vmem>>, vector<1x32x32xbf16>
    %50 = vector.shape_cast %49 : vector<1x32x32xbf16> to vector<32x32xbf16>
    %cst_43 = arith.constant dense<0.000000e+00> : vector<32x32xf32>
    %51 = tpu.matmul %48, %50, %cst_43 {dimension_numbers = #tpu.dot_dimension_numbers<[1], [0], [0], [1], [0, 0, 1, 1], [], []>} : vector<32x32xbf16>, vector<32x32xbf16>, vector<32x32xf32> -> vector<32x32xf32>
    %c1_44 = arith.constant 1 : index
    %c0_45 = arith.constant 0 : index
    %c0_46 = arith.constant 0 : index
    %52 = vector.load %arg6[%c1_44, %c0_45, %c0_46] : memref<4x1x32xf32, #tpu.memory_space<vmem>>, vector<1x1x32xf32>
    %53 = vector.shape_cast %52 : vector<1x1x32xf32> to vector<1x32xf32>
    %54 = vector.broadcast %53 : vector<1x32xf32> to vector<32x32xf32>
    %55 = arith.addf %51, %54 : vector<32x32xf32>
    %cst_47 = arith.constant 0.000000e+00 : f32
    %56 = vector.broadcast %cst_47 : f32 to vector<32x32xf32>
    %57 = arith.maximumf %55, %56 : vector<32x32xf32>
    %58 = arith.truncf %57 : vector<32x32xf32> to vector<32x32xbf16>
    %c1_48 = arith.constant 1 : index
    %c0_49 = arith.constant 0 : index
    %c0_50 = arith.constant 0 : index
    %59 = vector.load %arg11[%c1_48, %c0_49, %c0_50] : memref<4x32x256xbf16, #tpu.memory_space<vmem>>, vector<1x32x256xbf16>
    %60 = vector.shape_cast %59 : vector<1x32x256xbf16> to vector<32x256xbf16>
    %cst_51 = arith.constant dense<0.000000e+00> : vector<32x256xf32>
    %61 = tpu.matmul %58, %60, %cst_51 {dimension_numbers = #tpu.dot_dimension_numbers<[1], [0], [0], [1], [0, 0, 1, 1], [], []>} : vector<32x32xbf16>, vector<32x256xbf16>, vector<32x256xf32> -> vector<32x256xf32>
    %62 = arith.addf %30, %61 : vector<32x256xf32>
    %cst_52 = arith.constant dense<0.000000e+00> : vector<4x32xf32>
    %63 = tpu.matmul %2, %58, %cst_52 {dimension_numbers = #tpu.dot_dimension_numbers<[1], [0], [0], [1], [0, 0, 1, 1], [], []>} : vector<4x32xbf16>, vector<32x32xbf16>, vector<4x32xf32> -> vector<4x32xf32>
    %64 = arith.truncf %63 : vector<4x32xf32> to vector<4x32xbf16>
    %c1_53 = arith.constant 1 : index
    %c0_54 = arith.constant 0 : index
    %c0_55 = arith.constant 0 : index
    %65 = vector.load %arg7[%c1_53, %c0_54, %c0_55] : memref<4x32x256xbf16, #tpu.memory_space<vmem>>, vector<1x32x256xbf16>
    %66 = vector.shape_cast %65 : vector<1x32x256xbf16> to vector<32x256xbf16>
    %cst_56 = arith.constant dense<0.000000e+00> : vector<4x256xf32>
    %67 = tpu.matmul %64, %66, %cst_56 {dimension_numbers = #tpu.dot_dimension_numbers<[1], [0], [0], [1], [0, 0, 1, 1], [], []>} : vector<4x32xbf16>, vector<32x256xbf16>, vector<4x256xf32> -> vector<4x256xf32>
    %68 = arith.addf %36, %67 : vector<4x256xf32>
    %cst_57 = arith.constant dense<0.000000e+00> : vector<32x32xf32>
    %69 = tpu.matmul %1, %58, %cst_57 {dimension_numbers = #tpu.dot_dimension_numbers<[1], [0], [0], [1], [0, 0, 1, 1], [], []>} : vector<32x32xbf16>, vector<32x32xbf16>, vector<32x32xf32> -> vector<32x32xf32>
    %70 = arith.truncf %69 : vector<32x32xf32> to vector<32x32xbf16>
    %c2 = arith.constant 2 : index
    %c0_58 = arith.constant 0 : index
    %c0_59 = arith.constant 0 : index
    %71 = vector.load %arg3[%c2, %c0_58, %c0_59] : memref<4x32x32xbf16, #tpu.memory_space<vmem>>, vector<1x32x32xbf16>
    %72 = vector.shape_cast %71 : vector<1x32x32xbf16> to vector<32x32xbf16>
    %cst_60 = arith.constant dense<0.000000e+00> : vector<32x32xf32>
    %73 = tpu.matmul %70, %72, %cst_60 {dimension_numbers = #tpu.dot_dimension_numbers<[1], [0], [0], [1], [0, 0, 1, 1], [], []>} : vector<32x32xbf16>, vector<32x32xbf16>, vector<32x32xf32> -> vector<32x32xf32>
    %c2_61 = arith.constant 2 : index
    %c0_62 = arith.constant 0 : index
    %c0_63 = arith.constant 0 : index
    %74 = vector.load %arg4[%c2_61, %c0_62, %c0_63] : memref<4x1x32xf32, #tpu.memory_space<vmem>>, vector<1x1x32xf32>
    %75 = vector.shape_cast %74 : vector<1x1x32xf32> to vector<1x32xf32>
    %76 = vector.broadcast %75 : vector<1x32xf32> to vector<32x32xf32>
    %77 = arith.addf %73, %76 : vector<32x32xf32>
    %cst_64 = arith.constant 0.000000e+00 : f32
    %78 = vector.broadcast %cst_64 : f32 to vector<32x32xf32>
    %79 = arith.maximumf %77, %78 : vector<32x32xf32>
    %80 = arith.truncf %79 : vector<32x32xf32> to vector<32x32xbf16>
    %c2_65 = arith.constant 2 : index
    %c0_66 = arith.constant 0 : index
    %c0_67 = arith.constant 0 : index
    %81 = vector.load %arg5[%c2_65, %c0_66, %c0_67] : memref<4x32x32xbf16, #tpu.memory_space<vmem>>, vector<1x32x32xbf16>
    %82 = vector.shape_cast %81 : vector<1x32x32xbf16> to vector<32x32xbf16>
    %cst_68 = arith.constant dense<0.000000e+00> : vector<32x32xf32>
    %83 = tpu.matmul %80, %82, %cst_68 {dimension_numbers = #tpu.dot_dimension_numbers<[1], [0], [0], [1], [0, 0, 1, 1], [], []>} : vector<32x32xbf16>, vector<32x32xbf16>, vector<32x32xf32> -> vector<32x32xf32>
    %c2_69 = arith.constant 2 : index
    %c0_70 = arith.constant 0 : index
    %c0_71 = arith.constant 0 : index
    %84 = vector.load %arg6[%c2_69, %c0_70, %c0_71] : memref<4x1x32xf32, #tpu.memory_space<vmem>>, vector<1x1x32xf32>
    %85 = vector.shape_cast %84 : vector<1x1x32xf32> to vector<1x32xf32>
    %86 = vector.broadcast %85 : vector<1x32xf32> to vector<32x32xf32>
    %87 = arith.addf %83, %86 : vector<32x32xf32>
    %cst_72 = arith.constant 0.000000e+00 : f32
    %88 = vector.broadcast %cst_72 : f32 to vector<32x32xf32>
    %89 = arith.maximumf %87, %88 : vector<32x32xf32>
    %90 = arith.truncf %89 : vector<32x32xf32> to vector<32x32xbf16>
    %c2_73 = arith.constant 2 : index
    %c0_74 = arith.constant 0 : index
    %c0_75 = arith.constant 0 : index
    %91 = vector.load %arg11[%c2_73, %c0_74, %c0_75] : memref<4x32x256xbf16, #tpu.memory_space<vmem>>, vector<1x32x256xbf16>
    %92 = vector.shape_cast %91 : vector<1x32x256xbf16> to vector<32x256xbf16>
    %cst_76 = arith.constant dense<0.000000e+00> : vector<32x256xf32>
    %93 = tpu.matmul %90, %92, %cst_76 {dimension_numbers = #tpu.dot_dimension_numbers<[1], [0], [0], [1], [0, 0, 1, 1], [], []>} : vector<32x32xbf16>, vector<32x256xbf16>, vector<32x256xf32> -> vector<32x256xf32>
    %94 = arith.addf %62, %93 : vector<32x256xf32>
    %cst_77 = arith.constant dense<0.000000e+00> : vector<4x32xf32>
    %95 = tpu.matmul %2, %90, %cst_77 {dimension_numbers = #tpu.dot_dimension_numbers<[1], [0], [0], [1], [0, 0, 1, 1], [], []>} : vector<4x32xbf16>, vector<32x32xbf16>, vector<4x32xf32> -> vector<4x32xf32>
    %96 = arith.truncf %95 : vector<4x32xf32> to vector<4x32xbf16>
    %c2_78 = arith.constant 2 : index
    %c0_79 = arith.constant 0 : index
    %c0_80 = arith.constant 0 : index
    %97 = vector.load %arg7[%c2_78, %c0_79, %c0_80] : memref<4x32x256xbf16, #tpu.memory_space<vmem>>, vector<1x32x256xbf16>
    %98 = vector.shape_cast %97 : vector<1x32x256xbf16> to vector<32x256xbf16>
    %cst_81 = arith.constant dense<0.000000e+00> : vector<4x256xf32>
    %99 = tpu.matmul %96, %98, %cst_81 {dimension_numbers = #tpu.dot_dimension_numbers<[1], [0], [0], [1], [0, 0, 1, 1], [], []>} : vector<4x32xbf16>, vector<32x256xbf16>, vector<4x256xf32> -> vector<4x256xf32>
    %100 = arith.addf %68, %99 : vector<4x256xf32>
    %cst_82 = arith.constant dense<0.000000e+00> : vector<32x32xf32>
    %101 = tpu.matmul %1, %90, %cst_82 {dimension_numbers = #tpu.dot_dimension_numbers<[1], [0], [0], [1], [0, 0, 1, 1], [], []>} : vector<32x32xbf16>, vector<32x32xbf16>, vector<32x32xf32> -> vector<32x32xf32>
    %102 = arith.truncf %101 : vector<32x32xf32> to vector<32x32xbf16>
    %c3 = arith.constant 3 : index
    %c0_83 = arith.constant 0 : index
    %c0_84 = arith.constant 0 : index
    %103 = vector.load %arg3[%c3, %c0_83, %c0_84] : memref<4x32x32xbf16, #tpu.memory_space<vmem>>, vector<1x32x32xbf16>
    %104 = vector.shape_cast %103 : vector<1x32x32xbf16> to vector<32x32xbf16>
    %cst_85 = arith.constant dense<0.000000e+00> : vector<32x32xf32>
    %105 = tpu.matmul %102, %104, %cst_85 {dimension_numbers = #tpu.dot_dimension_numbers<[1], [0], [0], [1], [0, 0, 1, 1], [], []>} : vector<32x32xbf16>, vector<32x32xbf16>, vector<32x32xf32> -> vector<32x32xf32>
    %c3_86 = arith.constant 3 : index
    %c0_87 = arith.constant 0 : index
    %c0_88 = arith.constant 0 : index
    %106 = vector.load %arg4[%c3_86, %c0_87, %c0_88] : memref<4x1x32xf32, #tpu.memory_space<vmem>>, vector<1x1x32xf32>
    %107 = vector.shape_cast %106 : vector<1x1x32xf32> to vector<1x32xf32>
    %108 = vector.broadcast %107 : vector<1x32xf32> to vector<32x32xf32>
    %109 = arith.addf %105, %108 : vector<32x32xf32>
    %cst_89 = arith.constant 0.000000e+00 : f32
    %110 = vector.broadcast %cst_89 : f32 to vector<32x32xf32>
    %111 = arith.maximumf %109, %110 : vector<32x32xf32>
    %112 = arith.truncf %111 : vector<32x32xf32> to vector<32x32xbf16>
    %c3_90 = arith.constant 3 : index
    %c0_91 = arith.constant 0 : index
    %c0_92 = arith.constant 0 : index
    %113 = vector.load %arg5[%c3_90, %c0_91, %c0_92] : memref<4x32x32xbf16, #tpu.memory_space<vmem>>, vector<1x32x32xbf16>
    %114 = vector.shape_cast %113 : vector<1x32x32xbf16> to vector<32x32xbf16>
    %cst_93 = arith.constant dense<0.000000e+00> : vector<32x32xf32>
    %115 = tpu.matmul %112, %114, %cst_93 {dimension_numbers = #tpu.dot_dimension_numbers<[1], [0], [0], [1], [0, 0, 1, 1], [], []>} : vector<32x32xbf16>, vector<32x32xbf16>, vector<32x32xf32> -> vector<32x32xf32>
    %c3_94 = arith.constant 3 : index
    %c0_95 = arith.constant 0 : index
    %c0_96 = arith.constant 0 : index
    %116 = vector.load %arg6[%c3_94, %c0_95, %c0_96] : memref<4x1x32xf32, #tpu.memory_space<vmem>>, vector<1x1x32xf32>
    %117 = vector.shape_cast %116 : vector<1x1x32xf32> to vector<1x32xf32>
    %118 = vector.broadcast %117 : vector<1x32xf32> to vector<32x32xf32>
    %119 = arith.addf %115, %118 : vector<32x32xf32>
    %cst_97 = arith.constant 0.000000e+00 : f32
    %120 = vector.broadcast %cst_97 : f32 to vector<32x32xf32>
    %121 = arith.maximumf %119, %120 : vector<32x32xf32>
    %122 = arith.truncf %121 : vector<32x32xf32> to vector<32x32xbf16>
    %c3_98 = arith.constant 3 : index
    %c0_99 = arith.constant 0 : index
    %c0_100 = arith.constant 0 : index
    %123 = vector.load %arg11[%c3_98, %c0_99, %c0_100] : memref<4x32x256xbf16, #tpu.memory_space<vmem>>, vector<1x32x256xbf16>
    %124 = vector.shape_cast %123 : vector<1x32x256xbf16> to vector<32x256xbf16>
    %cst_101 = arith.constant dense<0.000000e+00> : vector<32x256xf32>
    %125 = tpu.matmul %122, %124, %cst_101 {dimension_numbers = #tpu.dot_dimension_numbers<[1], [0], [0], [1], [0, 0, 1, 1], [], []>} : vector<32x32xbf16>, vector<32x256xbf16>, vector<32x256xf32> -> vector<32x256xf32>
    %126 = arith.addf %94, %125 : vector<32x256xf32>
    %cst_102 = arith.constant dense<0.000000e+00> : vector<4x32xf32>
    %127 = tpu.matmul %2, %122, %cst_102 {dimension_numbers = #tpu.dot_dimension_numbers<[1], [0], [0], [1], [0, 0, 1, 1], [], []>} : vector<4x32xbf16>, vector<32x32xbf16>, vector<4x32xf32> -> vector<4x32xf32>
    %128 = arith.truncf %127 : vector<4x32xf32> to vector<4x32xbf16>
    %c3_103 = arith.constant 3 : index
    %c0_104 = arith.constant 0 : index
    %c0_105 = arith.constant 0 : index
    %129 = vector.load %arg7[%c3_103, %c0_104, %c0_105] : memref<4x32x256xbf16, #tpu.memory_space<vmem>>, vector<1x32x256xbf16>
    %130 = vector.shape_cast %129 : vector<1x32x256xbf16> to vector<32x256xbf16>
    %cst_106 = arith.constant dense<0.000000e+00> : vector<4x256xf32>
    %131 = tpu.matmul %128, %130, %cst_106 {dimension_numbers = #tpu.dot_dimension_numbers<[1], [0], [0], [1], [0, 0, 1, 1], [], []>} : vector<4x32xbf16>, vector<32x256xbf16>, vector<4x256xf32> -> vector<4x256xf32>
    %132 = arith.addf %100, %131 : vector<4x256xf32>
    %133 = vector.extract_strided_slice %132 {offsets = [0, 0], sizes = [4, 128], strides = [1, 1]} : vector<4x256xf32> to vector<4x128xf32>
    %c0_107 = arith.constant 0 : index
    %c0_108 = arith.constant 0 : index
    %c0_109 = arith.constant 0 : index
    %134 = vector.load %arg10[%c0_107, %c0_108, %c0_109] : memref<4x1x128xf32, #tpu.memory_space<vmem>>, vector<1x1x128xf32>
    %135 = vector.shape_cast %134 : vector<1x1x128xf32> to vector<1x128xf32>
    %136 = vector.broadcast %135 : vector<1x128xf32> to vector<4x128xf32>
    %137 = arith.addf %133, %136 : vector<4x128xf32>
    %cst_110 = arith.constant 0.000000e+00 : f32
    %138 = vector.broadcast %cst_110 : f32 to vector<4x128xf32>
    %139 = arith.maximumf %137, %138 : vector<4x128xf32>
    %140 = arith.truncf %139 : vector<4x128xf32> to vector<4x128xbf16>
    %c0_111 = arith.constant 0 : index
    %c0_112 = arith.constant 0 : index
    %141 = vector.load %arg8[%c0_111, %c0_112] : memref<128x128xbf16, #tpu.memory_space<vmem>>, vector<128x128xbf16>
    %cst_113 = arith.constant dense<0.000000e+00> : vector<4x128xf32>
    %142 = tpu.matmul %140, %141, %cst_113 {dimension_numbers = #tpu.dot_dimension_numbers<[1], [0], [0], [1], [0, 0, 1, 1], [], []>} : vector<4x128xbf16>, vector<128x128xbf16>, vector<4x128xf32> -> vector<4x128xf32>
    %c1_114 = arith.constant 1 : index
    %c0_115 = arith.constant 0 : index
    %c0_116 = arith.constant 0 : index
    %143 = vector.load %arg10[%c1_114, %c0_115, %c0_116] : memref<4x1x128xf32, #tpu.memory_space<vmem>>, vector<1x1x128xf32>
    %144 = vector.shape_cast %143 : vector<1x1x128xf32> to vector<1x128xf32>
    %145 = vector.broadcast %144 : vector<1x128xf32> to vector<4x128xf32>
    %146 = arith.addf %142, %145 : vector<4x128xf32>
    %cst_117 = arith.constant 0.000000e+00 : f32
    %147 = vector.broadcast %cst_117 : f32 to vector<4x128xf32>
    %148 = arith.maximumf %146, %147 : vector<4x128xf32>
    %149 = arith.truncf %148 : vector<4x128xf32> to vector<4x128xbf16>
    %c0_118 = arith.constant 0 : index
    %c0_119 = arith.constant 0 : index
    %150 = vector.load %arg9[%c0_118, %c0_119] : memref<128x128xbf16, #tpu.memory_space<vmem>>, vector<128x128xbf16>
    %cst_120 = arith.constant dense<0.000000e+00> : vector<4x128xf32>
    %151 = tpu.matmul %149, %150, %cst_120 {dimension_numbers = #tpu.dot_dimension_numbers<[1], [0], [0], [1], [0, 0, 1, 1], [], []>} : vector<4x128xbf16>, vector<128x128xbf16>, vector<4x128xf32> -> vector<4x128xf32>
    %c2_121 = arith.constant 2 : index
    %c0_122 = arith.constant 0 : index
    %c0_123 = arith.constant 0 : index
    %152 = vector.load %arg10[%c2_121, %c0_122, %c0_123] : memref<4x1x128xf32, #tpu.memory_space<vmem>>, vector<1x1x128xf32>
    %153 = vector.shape_cast %152 : vector<1x1x128xf32> to vector<1x128xf32>
    %154 = vector.broadcast %153 : vector<1x128xf32> to vector<4x128xf32>
    %155 = arith.addf %151, %154 : vector<4x128xf32>
    %cst_124 = arith.constant 0.000000e+00 : f32
    %156 = vector.broadcast %cst_124 : f32 to vector<4x128xf32>
    %157 = arith.maximumf %155, %156 : vector<4x128xf32>
    %158 = vector.extract_strided_slice %132 {offsets = [0, 128], sizes = [4, 128], strides = [1, 1]} : vector<4x256xf32> to vector<4x128xf32>
    %159 = arith.addf %157, %158 : vector<4x128xf32>
    %c3_125 = arith.constant 3 : index
    %c0_126 = arith.constant 0 : index
    %c0_127 = arith.constant 0 : index
    %160 = vector.load %arg10[%c3_125, %c0_126, %c0_127] : memref<4x1x128xf32, #tpu.memory_space<vmem>>, vector<1x1x128xf32>
    %161 = vector.shape_cast %160 : vector<1x1x128xf32> to vector<1x128xf32>
    %162 = vector.broadcast %161 : vector<1x128xf32> to vector<4x128xf32>
    %163 = arith.addf %159, %162 : vector<4x128xf32>
    %164 = vector.extract_strided_slice %126 {offsets = [0, 0], sizes = [32, 128], strides = [1, 1]} : vector<32x256xf32> to vector<32x128xf32>
    %c0_128 = arith.constant 0 : index
    %c0_129 = arith.constant 0 : index
    %c0_130 = arith.constant 0 : index
    %165 = vector.load %arg14[%c0_128, %c0_129, %c0_130] : memref<4x1x128xf32, #tpu.memory_space<vmem>>, vector<1x1x128xf32>
    %166 = vector.shape_cast %165 : vector<1x1x128xf32> to vector<1x128xf32>
    %167 = vector.broadcast %166 : vector<1x128xf32> to vector<32x128xf32>
    %168 = arith.addf %164, %167 : vector<32x128xf32>
    %cst_131 = arith.constant 0.000000e+00 : f32
    %169 = vector.broadcast %cst_131 : f32 to vector<32x128xf32>
    %170 = arith.maximumf %168, %169 : vector<32x128xf32>
    %171 = arith.truncf %170 : vector<32x128xf32> to vector<32x128xbf16>
    %c0_132 = arith.constant 0 : index
    %c0_133 = arith.constant 0 : index
    %172 = vector.load %arg12[%c0_132, %c0_133] : memref<128x128xbf16, #tpu.memory_space<vmem>>, vector<128x128xbf16>
    %cst_134 = arith.constant dense<0.000000e+00> : vector<32x128xf32>
    %173 = tpu.matmul %171, %172, %cst_134 {dimension_numbers = #tpu.dot_dimension_numbers<[1], [0], [0], [1], [0, 0, 1, 1], [], []>} : vector<32x128xbf16>, vector<128x128xbf16>, vector<32x128xf32> -> vector<32x128xf32>
    %c1_135 = arith.constant 1 : index
    %c0_136 = arith.constant 0 : index
    %c0_137 = arith.constant 0 : index
    %174 = vector.load %arg14[%c1_135, %c0_136, %c0_137] : memref<4x1x128xf32, #tpu.memory_space<vmem>>, vector<1x1x128xf32>
    %175 = vector.shape_cast %174 : vector<1x1x128xf32> to vector<1x128xf32>
    %176 = vector.broadcast %175 : vector<1x128xf32> to vector<32x128xf32>
    %177 = arith.addf %173, %176 : vector<32x128xf32>
    %cst_138 = arith.constant 0.000000e+00 : f32
    %178 = vector.broadcast %cst_138 : f32 to vector<32x128xf32>
    %179 = arith.maximumf %177, %178 : vector<32x128xf32>
    %180 = arith.truncf %179 : vector<32x128xf32> to vector<32x128xbf16>
    %c0_139 = arith.constant 0 : index
    %c0_140 = arith.constant 0 : index
    %181 = vector.load %arg13[%c0_139, %c0_140] : memref<128x128xbf16, #tpu.memory_space<vmem>>, vector<128x128xbf16>
    %cst_141 = arith.constant dense<0.000000e+00> : vector<32x128xf32>
    %182 = tpu.matmul %180, %181, %cst_141 {dimension_numbers = #tpu.dot_dimension_numbers<[1], [0], [0], [1], [0, 0, 1, 1], [], []>} : vector<32x128xbf16>, vector<128x128xbf16>, vector<32x128xf32> -> vector<32x128xf32>
    %c2_142 = arith.constant 2 : index
    %c0_143 = arith.constant 0 : index
    %c0_144 = arith.constant 0 : index
    %183 = vector.load %arg14[%c2_142, %c0_143, %c0_144] : memref<4x1x128xf32, #tpu.memory_space<vmem>>, vector<1x1x128xf32>
    %184 = vector.shape_cast %183 : vector<1x1x128xf32> to vector<1x128xf32>
    %185 = vector.broadcast %184 : vector<1x128xf32> to vector<32x128xf32>
    %186 = arith.addf %182, %185 : vector<32x128xf32>
    %cst_145 = arith.constant 0.000000e+00 : f32
    %187 = vector.broadcast %cst_145 : f32 to vector<32x128xf32>
    %188 = arith.maximumf %186, %187 : vector<32x128xf32>
    %189 = vector.extract_strided_slice %126 {offsets = [0, 128], sizes = [32, 128], strides = [1, 1]} : vector<32x256xf32> to vector<32x128xf32>
    %190 = arith.addf %188, %189 : vector<32x128xf32>
    %c3_146 = arith.constant 3 : index
    %c0_147 = arith.constant 0 : index
    %c0_148 = arith.constant 0 : index
    %191 = vector.load %arg14[%c3_146, %c0_147, %c0_148] : memref<4x1x128xf32, #tpu.memory_space<vmem>>, vector<1x1x128xf32>
    %192 = vector.shape_cast %191 : vector<1x1x128xf32> to vector<1x128xf32>
    %193 = vector.broadcast %192 : vector<1x128xf32> to vector<32x128xf32>
    %194 = arith.addf %190, %193 : vector<32x128xf32>
    %195 = arith.truncf %163 : vector<4x128xf32> to vector<4x128xbf16>
    %196 = arith.truncf %194 : vector<32x128xf32> to vector<32x128xbf16>
    %cst_149 = arith.constant dense<0.000000e+00> : vector<4x32xf32>
    %197 = tpu.matmul %195, %196, %cst_149 {dimension_numbers = #tpu.dot_dimension_numbers<[1], [1], [0], [0], [0, 0, 1, 0], [], []>} : vector<4x128xbf16>, vector<32x128xbf16>, vector<4x32xf32> -> vector<4x32xf32>
    %198 = arith.extf %2 : vector<4x32xbf16> to vector<4x32xf32>
    %199 = arith.mulf %197, %198 : vector<4x32xf32>
    %200 = arith.subf %197, %199 : vector<4x32xf32>
    %cst_150 = arith.constant 0.000000e+00 : f32
    %201 = vector.broadcast %cst_150 : f32 to vector<4x32xf32>
    %202 = arith.subf %201, %199 : vector<4x32xf32>
    %cst_151 = arith.constant 0.000000e+00 : f32
    %203 = vector.broadcast %cst_151 : f32 to vector<4x32xf32>
    %204 = arith.maximumf %202, %203 : vector<4x32xf32>
    %205 = math.absf %202 : vector<4x32xf32>
    %cst_152 = arith.constant 0.000000e+00 : f32
    %206 = vector.broadcast %cst_152 : f32 to vector<4x32xf32>
    %207 = arith.subf %206, %205 : vector<4x32xf32>
    %208 = math.exp %207 : vector<4x32xf32>
    %209 = math.log1p %208 : vector<4x32xf32>
    %210 = arith.addf %204, %209 : vector<4x32xf32>
    %cst_153 = arith.constant 0.693147182 : f32
    %211 = vector.broadcast %cst_153 : f32 to vector<4x32xf32>
    %212 = arith.subf %211, %210 : vector<4x32xf32>
    %213 = vector.shape_cast %212 : vector<4x32xf32> to vector<1x4x32xf32>
    %cst_154 = arith.constant dense<0.000000e+00> : vector<1xf32>
    %214 = vector.multi_reduction <add>, %213, %cst_154 [1, 2] : vector<1x4x32xf32> to vector<1xf32>
    %215 = vector.shape_cast %214 : vector<1xf32> to vector<1x1x1xf32>
    %216 = vector.extract %215[0, 0, 0] : f32 from vector<1x1x1xf32>
    %cst_155 = arith.constant 3.125000e-02 : f32
    %217 = arith.mulf %216, %cst_155 : f32
    %cst_156 = arith.constant 0.000000e+00 : f32
    %218 = vector.broadcast %cst_156 : f32 to vector<4x32xf32>
    %219 = arith.subf %218, %200 : vector<4x32xf32>
    %cst_157 = arith.constant 0.000000e+00 : f32
    %220 = vector.broadcast %cst_157 : f32 to vector<4x32xf32>
    %221 = arith.maximumf %219, %220 : vector<4x32xf32>
    %222 = math.absf %219 : vector<4x32xf32>
    %cst_158 = arith.constant 0.000000e+00 : f32
    %223 = vector.broadcast %cst_158 : f32 to vector<4x32xf32>
    %224 = arith.subf %223, %222 : vector<4x32xf32>
    %225 = math.exp %224 : vector<4x32xf32>
    %226 = math.log1p %225 : vector<4x32xf32>
    %227 = arith.addf %221, %226 : vector<4x32xf32>
    %228 = arith.addf %227, %200 : vector<4x32xf32>
    %cst_159 = arith.constant 0.693147182 : f32
    %229 = vector.broadcast %cst_159 : f32 to vector<4x32xf32>
    %230 = arith.subf %228, %229 : vector<4x32xf32>
    %231 = vector.shape_cast %230 : vector<4x32xf32> to vector<1x4x32xf32>
    %cst_160 = arith.constant dense<0.000000e+00> : vector<1xf32>
    %232 = vector.multi_reduction <add>, %231, %cst_160 [1, 2] : vector<1x4x32xf32> to vector<1xf32>
    %233 = vector.shape_cast %232 : vector<1xf32> to vector<1x1x1xf32>
    %234 = vector.extract %233[0, 0, 0] : f32 from vector<1x1x1xf32>
    %cst_161 = arith.constant 0.010416667 : f32
    %235 = arith.mulf %234, %cst_161 : f32
    %236 = arith.subf %235, %217 : f32
    %c0_162 = arith.constant 0 : index
    %237 = memref.load %arg15[%c0_162] : memref<1xf32, #tpu.memory_space<smem>>
    memref.store %236, %arg15[%c0_162] : memref<1xf32, #tpu.memory_space<smem>>
    return
  }
}

</mosaic_0001>

<llo_original>
// kernel: tpu_custom_call.1
$region0: #{tpu_custom_call.1}
  #allocation0 [shape = 'u32[]', space=smem, size = 0x4, offset = 0x4, fixed_abs, tag = 'smem constant byte address 0x4 - core index']
  #allocation1 [shape = 'u32[144,128]{1,0:T(1,128)}', space=vmem, size = 0x12000, scoped, tag = 'internal scratch']
  %s0 = inlined_call_operand.hbm [shape: bf16[32,32], index: 0, kind: input, shape index: {}]
  %s1 = inlined_call_operand.hbm [shape: bf16[32,32], index: 1, kind: input, shape index: {}]
  %s2 = inlined_call_operand.hbm [shape: bf16[4,32], index: 2, kind: input, shape index: {}]
  %s3 = inlined_call_operand.hbm [shape: bf16[4,32,32], index: 3, kind: input, shape index: {}]
  %s4 = inlined_call_operand.vmem [shape: f32[4,1,32], index: 4, kind: input, shape index: {}]
  %s5 = inlined_call_operand.hbm [shape: bf16[4,32,32], index: 5, kind: input, shape index: {}]
  %s6 = inlined_call_operand.vmem [shape: f32[4,1,32], index: 6, kind: input, shape index: {}]
  %s7 = inlined_call_operand.hbm [shape: bf16[4,32,256], index: 7, kind: input, shape index: {}]
  %s8 = inlined_call_operand.hbm [shape: bf16[128,128], index: 8, kind: input, shape index: {}]
  %s9 = inlined_call_operand.hbm [shape: bf16[128,128], index: 9, kind: input, shape index: {}]
  %s10 = inlined_call_operand.vmem [shape: f32[4,1,128], index: 10, kind: input, shape index: {}]
  %s11 = inlined_call_operand.hbm [shape: bf16[4,32,256], index: 11, kind: input, shape index: {}]
  %s12 = inlined_call_operand.hbm [shape: bf16[128,128], index: 12, kind: input, shape index: {}]
  %s13 = inlined_call_operand.hbm [shape: bf16[128,128], index: 13, kind: input, shape index: {}]
  %s14 = inlined_call_operand.vmem [shape: f32[4,1,128], index: 14, kind: input, shape index: {}]
  %s15 = inlined_call_operand.hbm [shape: f32[1], index: 15, kind: output, shape index: {}]
  %s16 = sld [smem:[#allocation0]]
  $region114: #{tpu_custom_call.1} parent=0
    _
  %s18 = ssub.s32 1, %s16
  %s19 = scalar_select 0, %s18, %s16
  $region1: #{tpu_custom_call.1} parent=0
    #allocation2 [shape = 'u8[8192]{0}', space=vmem, size = 0x2000, scoped, tag = 'input window, operand 0, single buffered']
    #allocation3 [shape = 's32[1]{0}', space=sflag, size = 0x4, scoped, tag = 'scoped memory for tpu_custom_call.1']
    #allocation4 [shape = 's32[1]{0}', space=sflag, size = 0x4, scoped, tag = 'scoped memory for tpu_custom_call.1']
    #allocation5 [shape = 'u8[8192]{0}', space=vmem, size = 0x2000, scoped, tag = 'input window, operand 1, single buffered']
    #allocation6 [shape = 's32[1]{0}', space=sflag, size = 0x4, scoped, tag = 'scoped memory for tpu_custom_call.1']
    #allocation7 [shape = 'u8[1024]{0}', space=vmem, size = 0x400, scoped, tag = 'input window, operand 2, single buffered']
    #allocation8 [shape = 'u8[32768]{0}', space=vmem, size = 0x8000, scoped, tag = 'input window, operand 3, single buffered']
    #allocation9 [shape = 's32[1]{0}', space=sflag, size = 0x4, scoped, tag = 'scoped memory for tpu_custom_call.1']
    #allocation10 [shape = 'u8[32768]{0}', space=vmem, size = 0x8000, scoped, tag = 'input window, operand 5, single buffered']
    #allocation11 [shape = 'u8[65536]{0}', space=vmem, size = 0x10000, scoped, tag = 'input window, operand 7, single buffered']
    #allocation12 [shape = 's32[1]{0}', space=sflag, size = 0x4, scoped, tag = 'scoped memory for tpu_custom_call.1']
    #allocation13 [shape = 'u8[32768]{0}', space=vmem, size = 0x8000, scoped, tag = 'input window, operand 8, single buffered']
    #allocation14 [shape = 'u8[32768]{0}', space=vmem, size = 0x8000, scoped, tag = 'input window, operand 9, single buffered']
    #allocation15 [shape = 's32[1]{0}', space=sflag, size = 0x4, scoped, tag = 'scoped memory for tpu_custom_call.1']
    #allocation16 [shape = 'u8[65536]{0}', space=vmem, size = 0x10000, scoped, tag = 'input window, operand 11, single buffered']
    #allocation17 [shape = 'u8[32768]{0}', space=vmem, size = 0x8000, scoped, tag = 'input window, operand 12, single buffered']
    #allocation18 [shape = 's32[1]{0}', space=sflag, size = 0x4, scoped, tag = 'scoped memory for tpu_custom_call.1']
    #allocation19 [shape = 'u8[32768]{0}', space=vmem, size = 0x8000, scoped, tag = 'input window, operand 13, single buffered']
    #allocation20 [shape = 'u8[512]{0}', space=smem, size = 0x200, scoped, tag = 'output window, operand 0, single buffered']
    %20 = vsyncpa [#allocation3], 0
    %21 = vsyncpa [#allocation6], 0
    %22 = vsyncpa [#allocation9], 0
    %23 = vsyncpa [#allocation12], 0
    %24 = vsyncpa [#allocation15], 0
    %25 = vsyncpa [#allocation18], 0
    %26 = vsyncpa [#allocation4], 0
    // Predicated region
    $region2: #{tpu_custom_call.1} parent=1 // pred_check
      _
    $region3: #{tpu_custom_call.1} parent=1 // pred_check_branch
      %28 = sbr.rel (0) target = $region5
    $region4: #{tpu_custom_call.1} parent=1 // pred_region
      %s30 = ssub.s32 256, 256
      %31 = vsyncadd [#allocation3], %s30
      %s32 = sshll.u32 [#allocation2], 4
      %s33 = int_to_ptr.vmem [resolvable:$true] %s32
      %38 = dma.hbm_to_vmem [thread:$0]  %s0, 256, %s33, [#allocation3], 64, 64, 4
    $region5: #{tpu_custom_call.1} parent=1 // pred_fallthru
      _
    // Predicated region
    $region6: #{tpu_custom_call.1} parent=1 // pred_check
      _
    $region7: #{tpu_custom_call.1} parent=1 // pred_check_branch
      %40 = sbr.rel (0) target = $region9
    $region8: #{tpu_custom_call.1} parent=1 // pred_region
      %s42 = ssub.s32 256, 256
      %43 = vsyncadd [#allocation6], %s42
      %s44 = sshll.u32 [#allocation5], 4
      %s45 = int_to_ptr.vmem [resolvable:$true] %s44
      %50 = dma.hbm_to_vmem [thread:$0]  %s1, 256, %s45, [#allocation6], 64, 64, 4
    $region9: #{tpu_custom_call.1} parent=1 // pred_fallthru
      _
    // Predicated region
    $region10: #{tpu_custom_call.1} parent=1 // pred_check
      _
    $region11: #{tpu_custom_call.1} parent=1 // pred_check_branch
      %52 = sbr.rel (0) target = $region13
    $region12: #{tpu_custom_call.1} parent=1 // pred_region
      %s54 = ssub.s32 32, 32
      %55 = vsyncadd [#allocation6], %s54
      %s57 = sshll.u32 [#allocation7], 4
      %s58 = int_to_ptr.vmem [resolvable:$true] %s57
      %60 = dma.hbm_to_vmem [thread:$0]  %s2, 32, %s58, [#allocation6]
    $region13: #{tpu_custom_call.1} parent=1 // pred_fallthru
      _
    // Predicated region
    $region14: #{tpu_custom_call.1} parent=1 // pred_check
      _
    $region15: #{tpu_custom_call.1} parent=1 // pred_check_branch
      %62 = sbr.rel (0) target = $region17
    $region16: #{tpu_custom_call.1} parent=1 // pred_region
      %s64 = ssub.s32 1024, 1024
      %65 = vsyncadd [#allocation9], %s64
      %s66 = sshll.u32 [#allocation8], 4
      %s67 = int_to_ptr.vmem [resolvable:$true] %s66
      %72 = dma.hbm_to_vmem [thread:$0]  %s3, 1024, %s67, [#allocation9], 64, 64, 4
    $region17: #{tpu_custom_call.1} parent=1 // pred_fallthru
      _
    // Predicated region
    $region18: #{tpu_custom_call.1} parent=1 // pred_check
      _
    $region19: #{tpu_custom_call.1} parent=1 // pred_check_branch
      %74 = sbr.rel (0) target = $region21
    $region20: #{tpu_custom_call.1} parent=1 // pred_region
      _
    $region21: #{tpu_custom_call.1} parent=1 // pred_fallthru
      _
    // Predicated region
    $region22: #{tpu_custom_call.1} parent=1 // pred_check
      _
    $region23: #{tpu_custom_call.1} parent=1 // pred_check_branch
      %76 = sbr.rel (0) target = $region25
    $region24: #{tpu_custom_call.1} parent=1 // pred_region
      %s78 = ssub.s32 1024, 1024
      %79 = vsyncadd [#allocation9], %s78
      %s80 = sshll.u32 [#allocation10], 4
      %s81 = int_to_ptr.vmem [resolvable:$true] %s80
      %86 = dma.hbm_to_vmem [thread:$0]  %s5, 1024, %s81, [#allocation9], 64, 64, 4
    $region25: #{tpu_custom_call.1} parent=1 // pred_fallthru
      _
    // Predicated region
    $region26: #{tpu_custom_call.1} parent=1 // pred_check
      _
    $region27: #{tpu_custom_call.1} parent=1 // pred_check_branch
      %88 = sbr.rel (0) target = $region29
    $region28: #{tpu_custom_call.1} parent=1 // pred_region
      _
    $region29: #{tpu_custom_call.1} parent=1 // pred_fallthru
      _
    // Predicated region
    $region30: #{tpu_custom_call.1} parent=1 // pred_check
      _
    $region31: #{tpu_custom_call.1} parent=1 // pred_check_branch
      %90 = sbr.rel (0) target = $region33
    $region32: #{tpu_custom_call.1} parent=1 // pred_region
      %s92 = ssub.s32 2048, 2048
      %93 = vsyncadd [#allocation12], %s92
      %s94 = sshll.u32 [#allocation11], 4
      %s95 = int_to_ptr.vmem [resolvable:$true] %s94
      %100 = dma.hbm_to_vmem [thread:$0]  %s7, 2048, %s95, [#allocation12], 128, 128, 8
    $region33: #{tpu_custom_call.1} parent=1 // pred_fallthru
      _
    // Predicated region
    $region34: #{tpu_custom_call.1} parent=1 // pred_check
      _
    $region35: #{tpu_custom_call.1} parent=1 // pred_check_branch
      %102 = sbr.rel (0) target = $region37
    $region36: #{tpu_custom_call.1} parent=1 // pred_region
      %s104 = ssub.s32 1024, 1024
      %105 = vsyncadd [#allocation12], %s104
      %s106 = sshll.u32 [#allocation13], 4
      %s107 = int_to_ptr.vmem [resolvable:$true] %s106
      %112 = dma.hbm_to_vmem [thread:$0]  %s8, 1024, %s107, [#allocation12], 64, 64, 4
    $region37: #{tpu_custom_call.1} parent=1 // pred_fallthru
      _
    // Predicated region
    $region38: #{tpu_custom_call.1} parent=1 // pred_check
      _
    $region39: #{tpu_custom_call.1} parent=1 // pred_check_branch
      %114 = sbr.rel (0) target = $region41
    $region40: #{tpu_custom_call.1} parent=1 // pred_region
      %s116 = ssub.s32 1024, 1024
      %117 = vsyncadd [#allocation15], %s116
      %s118 = sshll.u32 [#allocation14], 4
      %s119 = int_to_ptr.vmem [resolvable:$true] %s118
      %124 = dma.hbm_to_vmem [thread:$0]  %s9, 1024, %s119, [#allocation15], 64, 64, 4
    $region41: #{tpu_custom_call.1} parent=1 // pred_fallthru
      _
    // Predicated region
    $region42: #{tpu_custom_call.1} parent=1 // pred_check
      _
    $region43: #{tpu_custom_call.1} parent=1 // pred_check_branch
      %126 = sbr.rel (0) target = $region45
    $region44: #{tpu_custom_call.1} parent=1 // pred_region
      _
    $region45: #{tpu_custom_call.1} parent=1 // pred_fallthru
      _
    // Predicated region
    $region46: #{tpu_custom_call.1} parent=1 // pred_check
      _
    $region47: #{tpu_custom_call.1} parent=1 // pred_check_branch
      %128 = sbr.rel (0) target = $region49
    $region48: #{tpu_custom_call.1} parent=1 // pred_region
      %s130 = ssub.s32 2048, 2048
      %131 = vsyncadd [#allocation15], %s130
      %s132 = sshll.u32 [#allocation16], 4
      %s133 = int_to_ptr.vmem [resolvable:$true] %s132
      %138 = dma.hbm_to_vmem [thread:$0]  %s11, 2048, %s133, [#allocation15], 128, 128, 8
    $region49: #{tpu_custom_call.1} parent=1 // pred_fallthru
      _
    // Predicated region
    $region50: #{tpu_custom_call.1} parent=1 // pred_check
      _
    $region51: #{tpu_custom_call.1} parent=1 // pred_check_branch
      %140 = sbr.rel (0) target = $region53
    $region52: #{tpu_custom_call.1} parent=1 // pred_region
      %s142 = ssub.s32 1024, 1024
      %143 = vsyncadd [#allocation18], %s142
      %s144 = sshll.u32 [#allocation17], 4
      %s145 = int_to_ptr.vmem [resolvable:$true] %s144
      %150 = dma.hbm_to_vmem [thread:$0]  %s12, 1024, %s145, [#allocation18], 64, 64, 4
    $region53: #{tpu_custom_call.1} parent=1 // pred_fallthru
      _
    // Predicated region
    $region54: #{tpu_custom_call.1} parent=1 // pred_check
      _
    $region55: #{tpu_custom_call.1} parent=1 // pred_check_branch
      %152 = sbr.rel (0) target = $region57
    $region56: #{tpu_custom_call.1} parent=1 // pred_region
      %s154 = ssub.s32 1024, 1024
      %155 = vsyncadd [#allocation18], %s154
      %s156 = sshll.u32 [#allocation19], 4
      %s157 = int_to_ptr.vmem [resolvable:$true] %s156
      %162 = dma.hbm_to_vmem [thread:$0]  %s13, 1024, %s157, [#allocation18], 64, 64, 4
    $region57: #{tpu_custom_call.1} parent=1 // pred_fallthru
      _
    // Predicated region
    $region58: #{tpu_custom_call.1} parent=1 // pred_check
      _
    $region59: #{tpu_custom_call.1} parent=1 // pred_check_branch
      %164 = sbr.rel (0) target = $region61
    $region60: #{tpu_custom_call.1} parent=1 // pred_region
      _
    $region61: #{tpu_custom_call.1} parent=1 // pred_fallthru
      _
    // Predicated region
    $region62: #{tpu_custom_call.1} parent=1 // pred_check
      _
    $region63: #{tpu_custom_call.1} parent=1 // pred_check_branch
      %166 = sbr.rel (0) target = $region65
    $region64: #{tpu_custom_call.1} parent=1 // pred_region
      %167 = dma.done [#allocation3], 256
    $region65: #{tpu_custom_call.1} parent=1 // pred_fallthru
      _
    // Predicated region
    $region66: #{tpu_custom_call.1} parent=1 // pred_check
      _
    $region67: #{tpu_custom_call.1} parent=1 // pred_check_branch
      %169 = sbr.rel (0) target = $region69
    $region68: #{tpu_custom_call.1} parent=1 // pred_region
      %170 = dma.done [#allocation6], 256
    $region69: #{tpu_custom_call.1} parent=1 // pred_fallthru
      _
    // Predicated region
    $region70: #{tpu_custom_call.1} parent=1 // pred_check
      _
    $region71: #{tpu_custom_call.1} parent=1 // pred_check_branch
      %172 = sbr.rel (0) target = $region73
    $region72: #{tpu_custom_call.1} parent=1 // pred_region
      %173 = dma.done [#allocation6], 32
    $region73: #{tpu_custom_call.1} parent=1 // pred_fallthru
      _
    // Predicated region
    $region74: #{tpu_custom_call.1} parent=1 // pred_check
      _
    $region75: #{tpu_custom_call.1} parent=1 // pred_check_branch
      %175 = sbr.rel (0) target = $region77
    $region76: #{tpu_custom_call.1} parent=1 // pred_region
      %176 = dma.done [#allocation9], 1024
    $region77: #{tpu_custom_call.1} parent=1 // pred_fallthru
      _
    // Predicated region
    $region78: #{tpu_custom_call.1} parent=1 // pred_check
      _
    $region79: #{tpu_custom_call.1} parent=1 // pred_check_branch
      %178 = sbr.rel (0) target = $region81
    $region80: #{tpu_custom_call.1} parent=1 // pred_region
      %179 = dma.done [#allocation9], 1024
    $region81: #{tpu_custom_call.1} parent=1 // pred_fallthru
      _
    // Predicated region
    $region82: #{tpu_custom_call.1} parent=1 // pred_check
      _
    $region83: #{tpu_custom_call.1} parent=1 // pred_check_branch
      %181 = sbr.rel (0) target = $region85
    $region84: #{tpu_custom_call.1} parent=1 // pred_region
      %182 = dma.done [#allocation12], 2048
    $region85: #{tpu_custom_call.1} parent=1 // pred_fallthru
      _
    // Predicated region
    $region86: #{tpu_custom_call.1} parent=1 // pred_check
      _
    $region87: #{tpu_custom_call.1} parent=1 // pred_check_branch
      %184 = sbr.rel (0) target = $region89
    $region88: #{tpu_custom_call.1} parent=1 // pred_region
      %185 = dma.done [#allocation12], 1024
    $region89: #{tpu_custom_call.1} parent=1 // pred_fallthru
      _
    // Predicated region
    $region90: #{tpu_custom_call.1} parent=1 // pred_check
      _
    $region91: #{tpu_custom_call.1} parent=1 // pred_check_branch
      %187 = sbr.rel (0) target = $region93
    $region92: #{tpu_custom_call.1} parent=1 // pred_region
      %188 = dma.done [#allocation15], 1024
    $region93: #{tpu_custom_call.1} parent=1 // pred_fallthru
      _
    // Predicated region
    $region94: #{tpu_custom_call.1} parent=1 // pred_check
      _
    $region95: #{tpu_custom_call.1} parent=1 // pred_check_branch
      %190 = sbr.rel (0) target = $region97
    $region96: #{tpu_custom_call.1} parent=1 // pred_region
      %191 = dma.done [#allocation15], 2048
    $region97: #{tpu_custom_call.1} parent=1 // pred_fallthru
      _
    // Predicated region
    $region98: #{tpu_custom_call.1} parent=1 // pred_check
      _
    $region99: #{tpu_custom_call.1} parent=1 // pred_check_branch
      %193 = sbr.rel (0) target = $region101
    $region100: #{tpu_custom_call.1} parent=1 // pred_region
      %194 = dma.done [#allocation18], 1024
    $region101: #{tpu_custom_call.1} parent=1 // pred_fallthru
      _
    // Predicated region
    $region102: #{tpu_custom_call.1} parent=1 // pred_check
      _
    $region103: #{tpu_custom_call.1} parent=1 // pred_check_branch
      %196 = sbr.rel (0) target = $region105
    $region104: #{tpu_custom_call.1} parent=1 // pred_region
      %197 = dma.done [#allocation18], 1024
    $region105: #{tpu_custom_call.1} parent=1 // pred_fallthru
      _
    %v199 = vld [vmem:[#allocation2] sm:$0xf]
    %v200 = vld [vmem:[#allocation2 + $0x4] sm:$0xf]
    %v201 = vld [vmem:[#allocation2 + $0x8] sm:$0xf]
    %v202 = vld [vmem:[#allocation2 + $0xc] sm:$0xf]
    %v203 = vld [vmem:[#allocation5] sm:$0xf]
    %v204 = vld [vmem:[#allocation5 + $0x4] sm:$0xf]
    %v205 = vld [vmem:[#allocation5 + $0x8] sm:$0xf]
    %v206 = vld [vmem:[#allocation5 + $0xc] sm:$0xf]
    %v207 = vld [vmem:[#allocation7] sm:$0x3]
    %v212 = vunpack.c.l.b16 %v203
    %v213 = vunpack.c.l.b16 %v204
    %v214 = vunpack.c.l.b16 %v205
    %v215 = vunpack.c.l.b16 %v206
    %v216 = vpack.c.b16 %v213, %v212
    %v217 = vpack.c.b16 %v215, %v214
    %v222 = vunpack.c.l.b16 %v199
    %v223 = vunpack.c.l.b16 %v200
    %v224 = vunpack.c.l.b16 %v201
    %v225 = vunpack.c.l.b16 %v202
    %v226 = vpack.c.b16 %v223, %v222
    %v227 = vpack.c.b16 %v225, %v224
    %vm230 = vcmask 261120
    %v232 = vsel %vm230, %v216, 0
    %v235 = vsel %vm230, %v217, 0
    %237 = vmatprep.subr.bf16.mxu0 0
    %238 = vmatpush1.bf16.msra.mxu0 0
    %239 = vmatprep.subr.bf16.mxu0 0
    %240 = vmatpush1.bf16.msra.mxu0 0
    %241 = vmatprep.subr.bf16.mxu0 0
    %242 = vmatpush1.bf16.msra.mxu0 0
    %243 = vmatprep.subr.bf16.mxu0 0
    %244 = vmatpush1.bf16.msra.mxu0 0
    %245 = vmatprep.subr.bf16.mxu0 0
    %246 = vmatpush1.bf16.msra.mxu0 0
    %247 = vmatprep.subr.bf16.mxu0 0
    %248 = vmatpush1.bf16.msra.mxu0 0
    %249 = vmatprep.subr.bf16.mxu0 0
    %250 = vmatpush1.bf16.msra.mxu0 %v227
    %251 = vmatprep.subr.bf16.mxu0 0
    %252 = vmatpush1.bf16.msra.mxu0 %v226
    %253 = vmatprep.subr.bf16.mxu0 0
    %254 = vmatpush2.bf16.msra.mxu0 0
    %255 = vmatprep.subr.bf16.mxu0 0
    %256 = vmatpush2.bf16.msra.mxu0 0
    %257 = vmatprep.subr.bf16.mxu0 0
    %258 = vmatpush2.bf16.msra.mxu0 0
    %259 = vmatprep.subr.bf16.mxu0 0
    %260 = vmatpush2.bf16.msra.mxu0 0
    %261 = vmatprep.subr.bf16.mxu0 0
    %262 = vmatpush2.bf16.msra.mxu0 0
    %263 = vmatprep.subr.bf16.mxu0 0
    %264 = vmatpush2.bf16.msra.mxu0 0
    %265 = vmatprep.subr.bf16.mxu0 0
    %266 = vmatpush2.bf16.msra.mxu0 0
    %267 = vmatprep.subr.bf16.mxu0 0
    %268 = vmatpush2.bf16.msra.mxu0 0
    %269 = vmatprep.mubr.bf16.mxu0 0
    %270 = vmatmul.mubr.bf16.gmra.mxu0 %v232
    %v271 = vpop.f32.mrf.mxu0
    %v272 = vadd.f32 0.0, %v271
    %v273 = vpop.f32.mrf.mxu0
    %v274 = vpop.f32.mrf.mxu0
    %v275 = vadd.f32 0.0, %v274
    %v276 = vpop.f32.mrf.mxu0
    %277 = vmatprep.mubr.bf16.mxu0 0
    %278 = vmatmul.mubr.bf16.gmra.mxu0 %v235
    %v279 = vpop.f32.mrf.mxu0
    %v280 = vadd.f32 0.0, %v279
    %v281 = vpop.f32.mrf.mxu0
    %v282 = vpop.f32.mrf.mxu0
    %v283 = vadd.f32 0.0, %v282
    %v284 = vpop.f32.mrf.mxu0
    %285 = vdwg.mxu0
    %v286 = vpack.c.bf16 %v275, %v272
    %v287 = vpack.c.bf16 %v283, %v280
    %v288 = vld [vmem:[#allocation8] sm:$0xf]
    %v289 = vld [vmem:[#allocation8 + $0x4] sm:$0xf]
    %v290 = vld [vmem:[#allocation8 + $0x8] sm:$0xf]
    %v291 = vld [vmem:[#allocation8 + $0xc] sm:$0xf]
    %v292 = vld [vmem:[%s4] sm:$0x1]
    %v294 = vlaneseq
    %v295 = vshrl.u32 %v294, 7
    %v296 = vsub.s32 0, %v295
    %v297 = vrot.slane %v292, %v296
    %v303 = vunpack.c.l.b16 %v288
    %v304 = vunpack.c.l.b16 %v289
    %v305 = vunpack.c.l.b16 %v290
    %v306 = vunpack.c.l.b16 %v291
    %v307 = vpack.c.b16 %v304, %v303
    %v308 = vpack.c.b16 %v306, %v305
    %v312 = vsel %vm230, %v286, 0
    %v315 = vsel %vm230, %v287, 0
    %317 = vmatprep.subr.bf16.mxu0 0
    %318 = vmatpush1.bf16.msra.mxu0 0
    %319 = vmatprep.subr.bf16.mxu0 0
    %320 = vmatpush1.bf16.msra.mxu0 0
    %321 = vmatprep.subr.bf16.mxu0 0
    %322 = vmatpush1.bf16.msra.mxu0 0
    %323 = vmatprep.subr.bf16.mxu0 0
    %324 = vmatpush1.bf16.msra.mxu0 0
    %325 = vmatprep.subr.bf16.mxu0 0
    %326 = vmatpush1.bf16.msra.mxu0 0
    %327 = vmatprep.subr.bf16.mxu0 0
    %328 = vmatpush1.bf16.msra.mxu0 0
    %329 = vmatprep.subr.bf16.mxu0 0
    %330 = vmatpush1.bf16.msra.mxu0 %v308
    %331 = vmatprep.subr.bf16.mxu0 0
    %332 = vmatpush1.bf16.msra.mxu0 %v307
    %333 = vmatprep.subr.bf16.mxu0 0
    %334 = vmatpush2.bf16.msra.mxu0 0
    %335 = vmatprep.subr.bf16.mxu0 0
    %336 = vmatpush2.bf16.msra.mxu0 0
    %337 = vmatprep.subr.bf16.mxu0 0
    %338 = vmatpush2.bf16.msra.mxu0 0
    %339 = vmatprep.subr.bf16.mxu0 0
    %340 = vmatpush2.bf16.msra.mxu0 0
    %341 = vmatprep.subr.bf16.mxu0 0
    %342 = vmatpush2.bf16.msra.mxu0 0
    %343 = vmatprep.subr.bf16.mxu0 0
    %344 = vmatpush2.bf16.msra.mxu0 0
    %345 = vmatprep.subr.bf16.mxu0 0
    %346 = vmatpush2.bf16.msra.mxu0 0
    %347 = vmatprep.subr.bf16.mxu0 0
    %348 = vmatpush2.bf16.msra.mxu0 0
    %349 = vmatprep.mubr.bf16.mxu0 0
    %350 = vmatmul.mubr.bf16.gmra.mxu0 %v312
    %v351 = vpop.f32.mrf.mxu0
    %v352 = vadd.f32 %v297, %v351
    %v353 = vpop.f32.mrf.mxu0
    %v354 = vpop.f32.mrf.mxu0
    %v355 = vadd.f32 %v297, %v354
    %v356 = vpop.f32.mrf.mxu0
    %357 = vmatprep.mubr.bf16.mxu0 0
    %358 = vmatmul.mubr.bf16.gmra.mxu0 %v315
    %v359 = vpop.f32.mrf.mxu0
    %v360 = vadd.f32 %v297, %v359
    %v361 = vpop.f32.mrf.mxu0
    %v362 = vpop.f32.mrf.mxu0
    %v363 = vadd.f32 %v297, %v362
    %v364 = vpop.f32.mrf.mxu0
    %365 = vdwg.mxu0
    %v366 = vmax.f32 %v352, 0.0
    %v367 = vmax.f32 %v355, 0.0
    %v368 = vmax.f32 %v360, 0.0
    %v369 = vmax.f32 %v363, 0.0
    %v370 = vpack.c.bf16 %v367, %v366
    %v371 = vpack.c.bf16 %v369, %v368
    %v372 = vld [vmem:[#allocation10] sm:$0xf]
    %v373 = vld [vmem:[#allocation10 + $0x4] sm:$0xf]
    %v374 = vld [vmem:[#allocation10 + $0x8] sm:$0xf]
    %v375 = vld [vmem:[#allocation10 + $0xc] sm:$0xf]
    %v376 = vld [vmem:[%s6] sm:$0x1]
    %v378 = vlaneseq
    %v379 = vshrl.u32 %v378, 7
    %v380 = vsub.s32 0, %v379
    %v381 = vrot.slane %v376, %v380
    %v387 = vunpack.c.l.b16 %v372
    %v388 = vunpack.c.l.b16 %v373
    %v389 = vunpack.c.l.b16 %v374
    %v390 = vunpack.c.l.b16 %v375
    %v391 = vpack.c.b16 %v388, %v387
    %v392 = vpack.c.b16 %v390, %v389
    %v396 = vsel %vm230, %v370, 0
    %v399 = vsel %vm230, %v371, 0
    %401 = vmatprep.subr.bf16.mxu0 0
    %402 = vmatpush1.bf16.msra.mxu0 0
    %403 = vmatprep.subr.bf16.mxu0 0
    %404 = vmatpush1.bf16.msra.mxu0 0
    %405 = vmatprep.subr.bf16.mxu0 0
    %406 = vmatpush1.bf16.msra.mxu0 0
    %407 = vmatprep.subr.bf16.mxu0 0
    %408 = vmatpush1.bf16.msra.mxu0 0
    %409 = vmatprep.subr.bf16.mxu0 0
    %410 = vmatpush1.bf16.msra.mxu0 0
    %411 = vmatprep.subr.bf16.mxu0 0
    %412 = vmatpush1.bf16.msra.mxu0 0
    %413 = vmatprep.subr.bf16.mxu0 0
    %414 = vmatpush1.bf16.msra.mxu0 %v392
    %415 = vmatprep.subr.bf16.mxu0 0
    %416 = vmatpush1.bf16.msra.mxu0 %v391
    %417 = vmatprep.subr.bf16.mxu0 0
    %418 = vmatpush2.bf16.msra.mxu0 0
    %419 = vmatprep.subr.bf16.mxu0 0
    %420 = vmatpush2.bf16.msra.mxu0 0
    %421 = vmatprep.subr.bf16.mxu0 0
    %422 = vmatpush2.bf16.msra.mxu0 0
    %423 = vmatprep.subr.bf16.mxu0 0
    %424 = vmatpush2.bf16.msra.mxu0 0
    %425 = vmatprep.subr.bf16.mxu0 0
    %426 = vmatpush2.bf16.msra.mxu0 0
    %427 = vmatprep.subr.bf16.mxu0 0
    %428 = vmatpush2.bf16.msra.mxu0 0
    %429 = vmatprep.subr.bf16.mxu0 0
    %430 = vmatpush2.bf16.msra.mxu0 0
    %431 = vmatprep.subr.bf16.mxu0 0
    %432 = vmatpush2.bf16.msra.mxu0 0
    %433 = vmatprep.mubr.bf16.mxu0 0
    %434 = vmatmul.mubr.bf16.gmra.mxu0 %v396
    %v435 = vpop.f32.mrf.mxu0
    %v436 = vadd.f32 %v381, %v435
    %v437 = vpop.f32.mrf.mxu0
    %v438 = vpop.f32.mrf.mxu0
    %v439 = vadd.f32 %v381, %v438
    %v440 = vpop.f32.mrf.mxu0
    %441 = vmatprep.mubr.bf16.mxu0 0
    %442 = vmatmul.mubr.bf16.gmra.mxu0 %v399
    %v443 = vpop.f32.mrf.mxu0
    %v444 = vadd.f32 %v381, %v443
    %v445 = vpop.f32.mrf.mxu0
    %v446 = vpop.f32.mrf.mxu0
    %v447 = vadd.f32 %v381, %v446
    %v448 = vpop.f32.mrf.mxu0
    %449 = vdwg.mxu0
    %v450 = vmax.f32 %v436, 0.0
    %v451 = vmax.f32 %v439, 0.0
    %v452 = vmax.f32 %v444, 0.0
    %v453 = vmax.f32 %v447, 0.0
    %v454 = vpack.c.bf16 %v451, %v450
    %v455 = vpack.c.bf16 %v453, %v452
    %v456 = vld [vmem:[#allocation16] sm:$0xff]
    %v457 = vld [vmem:[#allocation16 + $0x8] sm:$0xff]
    %v458 = vld [vmem:[#allocation16 + $0x10] sm:$0xff]
    %v459 = vld [vmem:[#allocation16 + $0x18] sm:$0xff]
    %v461 = vsel %vm230, %v207, 0
    %463 = vmatprep.subr.bf16.mxu0 0
    %464 = vmatpush1.bf16.msra.mxu0 0
    %465 = vmatprep.subr.bf16.mxu0 0
    %466 = vmatpush1.bf16.msra.mxu0 0
    %467 = vmatprep.subr.bf16.mxu0 0
    %468 = vmatpush1.bf16.msra.mxu0 0
    %469 = vmatprep.subr.bf16.mxu0 0
    %470 = vmatpush1.bf16.msra.mxu0 0
    %471 = vmatprep.subr.bf16.mxu0 0
    %472 = vmatpush1.bf16.msra.mxu0 0
    %473 = vmatprep.subr.bf16.mxu0 0
    %474 = vmatpush1.bf16.msra.mxu0 0
    %475 = vmatprep.subr.bf16.mxu0 0
    %476 = vmatpush1.bf16.msra.mxu0 %v455
    %477 = vmatprep.subr.bf16.mxu0 0
    %478 = vmatpush1.bf16.msra.mxu0 %v454
    %479 = vmatprep.subr.bf16.mxu0 0
    %480 = vmatpush2.bf16.msra.mxu0 0
    %481 = vmatprep.subr.bf16.mxu0 0
    %482 = vmatpush2.bf16.msra.mxu0 0
    %483 = vmatprep.subr.bf16.mxu0 0
    %484 = vmatpush2.bf16.msra.mxu0 0
    %485 = vmatprep.subr.bf16.mxu0 0
    %486 = vmatpush2.bf16.msra.mxu0 0
    %487 = vmatprep.subr.bf16.mxu0 0
    %488 = vmatpush2.bf16.msra.mxu0 0
    %489 = vmatprep.subr.bf16.mxu0 0
    %490 = vmatpush2.bf16.msra.mxu0 0
    %491 = vmatprep.subr.bf16.mxu0 0
    %492 = vmatpush2.bf16.msra.mxu0 0
    %493 = vmatprep.subr.bf16.mxu0 0
    %494 = vmatpush2.bf16.msra.mxu0 0
    %495 = vmatprep.mubr.bf16.mxu0 0
    %496 = vmatmul.mubr.bf16.gmra.mxu0 %v461
    %v497 = vpop.f32.mrf.mxu0
    %v498 = vadd.f32 0.0, %v497
    %v499 = vpop.f32.mrf.mxu0
    %v500 = vpop.f32.mrf.mxu0
    %v501 = vpop.f32.mrf.mxu0
    %502 = vdwg.mxu0
    %v503 = vpack.c.bf16 %v498, %v498
    %v504 = vld [vmem:[#allocation11] sm:$0xff]
    %v505 = vld [vmem:[#allocation11 + $0x8] sm:$0xff]
    %v506 = vld [vmem:[#allocation11 + $0x10] sm:$0xff]
    %v507 = vld [vmem:[#allocation11 + $0x18] sm:$0xff]
    %508 = vmatprep.subr.bf16.mxu0 0
    %509 = vmatpush1.bf16.msra.mxu0 0
    %510 = vmatprep.subr.bf16.mxu0 0
    %511 = vmatpush1.bf16.msra.mxu0 0
    %512 = vmatprep.subr.bf16.mxu0 0
    %513 = vmatpush1.bf16.msra.mxu0 0
    %514 = vmatprep.subr.bf16.mxu0 0
    %515 = vmatpush1.bf16.msra.mxu0 0
    %516 = vmatprep.subr.bf16.mxu0 0
    %517 = vmatpush1.bf16.msra.mxu0 0
    %518 = vmatprep.subr.bf16.mxu0 0
    %519 = vmatpush1.bf16.msra.mxu0 0
    %520 = vmatprep.subr.bf16.mxu0 0
    %521 = vmatpush1.bf16.msra.mxu0 %v455
    %522 = vmatprep.subr.bf16.mxu0 0
    %523 = vmatpush1.bf16.msra.mxu0 %v454
    %524 = vmatprep.subr.bf16.mxu0 0
    %525 = vmatpush2.bf16.msra.mxu0 0
    %526 = vmatprep.subr.bf16.mxu0 0
    %527 = vmatpush2.bf16.msra.mxu0 0
    %528 = vmatprep.subr.bf16.mxu0 0
    %529 = vmatpush2.bf16.msra.mxu0 0
    %530 = vmatprep.subr.bf16.mxu0 0
    %531 = vmatpush2.bf16.msra.mxu0 0
    %532 = vmatprep.subr.bf16.mxu0 0
    %533 = vmatpush2.bf16.msra.mxu0 0
    %534 = vmatprep.subr.bf16.mxu0 0
    %535 = vmatpush2.bf16.msra.mxu0 0
    %536 = vmatprep.subr.bf16.mxu0 0
    %537 = vmatpush2.bf16.msra.mxu0 0
    %538 = vmatprep.subr.bf16.mxu0 0
    %539 = vmatpush2.bf16.msra.mxu0 0
    %540 = vmatprep.mubr.bf16.mxu0 0
    %541 = vmatmul.mubr.bf16.gmra.mxu0 %v232
    %v542 = vpop.f32.mrf.mxu0
    %v543 = vadd.f32 0.0, %v542
    %v544 = vpop.f32.mrf.mxu0
    %v545 = vpop.f32.mrf.mxu0
    %v546 = vadd.f32 0.0, %v545
    %v547 = vpop.f32.mrf.mxu0
    %548 = vmatprep.mubr.bf16.mxu0 0
    %549 = vmatmul.mubr.bf16.gmra.mxu0 %v235
    %v550 = vpop.f32.mrf.mxu0
    %v551 = vadd.f32 0.0, %v550
    %v552 = vpop.f32.mrf.mxu0
    %v553 = vpop.f32.mrf.mxu0
    %v554 = vadd.f32 0.0, %v553
    %v555 = vpop.f32.mrf.mxu0
    %556 = vdwg.mxu0
    %v557 = vpack.c.bf16 %v546, %v543
    %v558 = vpack.c.bf16 %v554, %v551
    %s559 = scalar_lea.vmem [#allocation8], 16
    %v560 = vld [vmem:[%s559] sm:$0xf]
    %v561 = vld [vmem:[%s559 + $0x4] sm:$0xf]
    %v562 = vld [vmem:[%s559 + $0x8] sm:$0xf]
    %v563 = vld [vmem:[%s559 + $0xc] sm:$0xf]
    %s564 = scalar_lea.vmem %s4, 1
    %v565 = vld [vmem:[%s564] sm:$0x1]
    %v567 = vlaneseq
    %v568 = vshrl.u32 %v567, 7
    %v569 = vsub.s32 0, %v568
    %v570 = vrot.slane %v565, %v569
    %v576 = vunpack.c.l.b16 %v560
    %v577 = vunpack.c.l.b16 %v561
    %v578 = vunpack.c.l.b16 %v562
    %v579 = vunpack.c.l.b16 %v563
    %v580 = vpack.c.b16 %v577, %v576
    %v581 = vpack.c.b16 %v579, %v578
    %v585 = vsel %vm230, %v557, 0
    %v588 = vsel %vm230, %v558, 0
    %590 = vmatprep.subr.bf16.mxu0 0
    %591 = vmatpush1.bf16.msra.mxu0 0
    %592 = vmatprep.subr.bf16.mxu0 0
    %593 = vmatpush1.bf16.msra.mxu0 0
    %594 = vmatprep.subr.bf16.mxu0 0
    %595 = vmatpush1.bf16.msra.mxu0 0
    %596 = vmatprep.subr.bf16.mxu0 0
    %597 = vmatpush1.bf16.msra.mxu0 0
    %598 = vmatprep.subr.bf16.mxu0 0
    %599 = vmatpush1.bf16.msra.mxu0 0
    %600 = vmatprep.subr.bf16.mxu0 0
    %601 = vmatpush1.bf16.msra.mxu0 0
    %602 = vmatprep.subr.bf16.mxu0 0
    %603 = vmatpush1.bf16.msra.mxu0 %v581
    %604 = vmatprep.subr.bf16.mxu0 0
    %605 = vmatpush1.bf16.msra.mxu0 %v580
    %606 = vmatprep.subr.bf16.mxu0 0
    %607 = vmatpush2.bf16.msra.mxu0 0
    %608 = vmatprep.subr.bf16.mxu0 0
    %609 = vmatpush2.bf16.msra.mxu0 0
    %610 = vmatprep.subr.bf16.mxu0 0
    %611 = vmatpush2.bf16.msra.mxu0 0
    %612 = vmatprep.subr.bf16.mxu0 0
    %613 = vmatpush2.bf16.msra.mxu0 0
    %614 = vmatprep.subr.bf16.mxu0 0
    %615 = vmatpush2.bf16.msra.mxu0 0
    %616 = vmatprep.subr.bf16.mxu0 0
    %617 = vmatpush2.bf16.msra.mxu0 0
    %618 = vmatprep.subr.bf16.mxu0 0
    %619 = vmatpush2.bf16.msra.mxu0 0
    %620 = vmatprep.subr.bf16.mxu0 0
    %621 = vmatpush2.bf16.msra.mxu0 0
    %622 = vmatprep.mubr.bf16.mxu0 0
    %623 = vmatmul.mubr.bf16.gmra.mxu0 %v585
    %v624 = vpop.f32.mrf.mxu0
    %v625 = vadd.f32 %v570, %v624
    %v626 = vpop.f32.mrf.mxu0
    %v627 = vpop.f32.mrf.mxu0
    %v628 = vadd.f32 %v570, %v627
    %v629 = vpop.f32.mrf.mxu0
    %630 = vmatprep.mubr.bf16.mxu0 0
    %631 = vmatmul.mubr.bf16.gmra.mxu0 %v588
    %v632 = vpop.f32.mrf.mxu0
    %v633 = vadd.f32 %v570, %v632
    %v634 = vpop.f32.mrf.mxu0
    %v635 = vpop.f32.mrf.mxu0
    %v636 = vadd.f32 %v570, %v635
    %v637 = vpop.f32.mrf.mxu0
    %638 = vdwg.mxu0
    %v639 = vmax.f32 %v625, 0.0
    %v640 = vmax.f32 %v628, 0.0
    %v641 = vmax.f32 %v633, 0.0
    %v642 = vmax.f32 %v636, 0.0
    %v643 = vpack.c.bf16 %v640, %v639
    %v644 = vpack.c.bf16 %v642, %v641
    %s645 = scalar_lea.vmem [#allocation10], 16
    %v646 = vld [vmem:[%s645] sm:$0xf]
    %v647 = vld [vmem:[%s645 + $0x4] sm:$0xf]
    %v648 = vld [vmem:[%s645 + $0x8] sm:$0xf]
    %v649 = vld [vmem:[%s645 + $0xc] sm:$0xf]
    %s650 = scalar_lea.vmem %s6, 1
    %v651 = vld [vmem:[%s650] sm:$0x1]
    %v653 = vlaneseq
    %v654 = vshrl.u32 %v653, 7
    %v655 = vsub.s32 0, %v654
    %v656 = vrot.slane %v651, %v655
    %v662 = vunpack.c.l.b16 %v646
    %v663 = vunpack.c.l.b16 %v647
    %v664 = vunpack.c.l.b16 %v648
    %v665 = vunpack.c.l.b16 %v649
    %v666 = vpack.c.b16 %v663, %v662
    %v667 = vpack.c.b16 %v665, %v664
    %v671 = vsel %vm230, %v643, 0
    %v674 = vsel %vm230, %v644, 0
    %676 = vmatprep.subr.bf16.mxu0 0
    %677 = vmatpush1.bf16.msra.mxu0 0
    %678 = vmatprep.subr.bf16.mxu0 0
    %679 = vmatpush1.bf16.msra.mxu0 0
    %680 = vmatprep.subr.bf16.mxu0 0
    %681 = vmatpush1.bf16.msra.mxu0 0
    %682 = vmatprep.subr.bf16.mxu0 0
    %683 = vmatpush1.bf16.msra.mxu0 0
    %684 = vmatprep.subr.bf16.mxu0 0
    %685 = vmatpush1.bf16.msra.mxu0 0
    %686 = vmatprep.subr.bf16.mxu0 0
    %687 = vmatpush1.bf16.msra.mxu0 0
    %688 = vmatprep.subr.bf16.mxu0 0
    %689 = vmatpush1.bf16.msra.mxu0 %v667
    %690 = vmatprep.subr.bf16.mxu0 0
    %691 = vmatpush1.bf16.msra.mxu0 %v666
    %692 = vmatprep.subr.bf16.mxu0 0
    %693 = vmatpush2.bf16.msra.mxu0 0
    %694 = vmatprep.subr.bf16.mxu0 0
    %695 = vmatpush2.bf16.msra.mxu0 0
    %696 = vmatprep.subr.bf16.mxu0 0
    %697 = vmatpush2.bf16.msra.mxu0 0
    %698 = vmatprep.subr.bf16.mxu0 0
    %699 = vmatpush2.bf16.msra.mxu0 0
    %700 = vmatprep.subr.bf16.mxu0 0
    %701 = vmatpush2.bf16.msra.mxu0 0
    %702 = vmatprep.subr.bf16.mxu0 0
    %703 = vmatpush2.bf16.msra.mxu0 0
    %704 = vmatprep.subr.bf16.mxu0 0
    %705 = vmatpush2.bf16.msra.mxu0 0
    %706 = vmatprep.subr.bf16.mxu0 0
    %707 = vmatpush2.bf16.msra.mxu0 0
    %708 = vmatprep.mubr.bf16.mxu0 0
    %709 = vmatmul.mubr.bf16.gmra.mxu0 %v671
    %v710 = vpop.f32.mrf.mxu0
    %v711 = vadd.f32 %v656, %v710
    %v712 = vpop.f32.mrf.mxu0
    %v713 = vpop.f32.mrf.mxu0
    %v714 = vadd.f32 %v656, %v713
    %v715 = vpop.f32.mrf.mxu0
    %716 = vmatprep.mubr.bf16.mxu0 0
    %717 = vmatmul.mubr.bf16.gmra.mxu0 %v674
    %v718 = vpop.f32.mrf.mxu0
    %v719 = vadd.f32 %v656, %v718
    %v720 = vpop.f32.mrf.mxu0
    %v721 = vpop.f32.mrf.mxu0
    %v722 = vadd.f32 %v656, %v721
    %v723 = vpop.f32.mrf.mxu0
    %724 = vdwg.mxu0
    %v725 = vmax.f32 %v711, 0.0
    %v726 = vmax.f32 %v714, 0.0
    %v727 = vmax.f32 %v719, 0.0
    %v728 = vmax.f32 %v722, 0.0
    %v729 = vpack.c.bf16 %v726, %v725
    %v730 = vpack.c.bf16 %v728, %v727
    %s731 = scalar_lea.vmem [#allocation16], 32
    %v732 = vld [vmem:[%s731] sm:$0xff]
    %v733 = vld [vmem:[%s731 + $0x8] sm:$0xff]
    %v734 = vld [vmem:[%s731 + $0x10] sm:$0xff]
    %v735 = vld [vmem:[%s731 + $0x18] sm:$0xff]
    %v740 = vunpack.c.l.b16 %v732
    %v741 = vunpack.c.h.b16 %v732
    %v742 = vunpack.c.l.b16 %v733
    %v743 = vunpack.c.h.b16 %v733
    %v744 = vunpack.c.l.b16 %v734
    %v745 = vunpack.c.h.b16 %v734
    %v746 = vunpack.c.l.b16 %v735
    %v747 = vunpack.c.h.b16 %v735
    %v748 = vpack.c.b16 %v742, %v740
    %v749 = vpack.c.b16 %v743, %v741
    %v750 = vpack.c.b16 %v746, %v744
    %v751 = vpack.c.b16 %v747, %v745
    %v757 = vsel %vm230, %v729, 0
    %v760 = vsel %vm230, %v730, 0
    %762 = vmatprep.subr.bf16.mxu0 0
    %763 = vmatpush1.bf16.msra.mxu0 0
    %764 = vmatprep.subr.bf16.mxu0 0
    %765 = vmatpush1.bf16.msra.mxu0 0
    %766 = vmatprep.subr.bf16.mxu0 0
    %767 = vmatpush1.bf16.msra.mxu0 0
    %768 = vmatprep.subr.bf16.mxu0 0
    %769 = vmatpush1.bf16.msra.mxu0 0
    %770 = vmatprep.subr.bf16.mxu0 0
    %771 = vmatpush1.bf16.msra.mxu0 0
    %772 = vmatprep.subr.bf16.mxu0 0
    %773 = vmatpush1.bf16.msra.mxu0 0
    %774 = vmatprep.subr.bf16.mxu0 %v751
    %775 = vmatpush1.bf16.msra.mxu0 %v750
    %776 = vmatprep.subr.bf16.mxu0 %v749
    %777 = vmatpush1.bf16.msra.mxu0 %v748
    %778 = vmatprep.subr.bf16.mxu0 0
    %779 = vmatpush2.bf16.msra.mxu0 0
    %780 = vmatprep.subr.bf16.mxu0 0
    %781 = vmatpush2.bf16.msra.mxu0 0
    %782 = vmatprep.subr.bf16.mxu0 0
    %783 = vmatpush2.bf16.msra.mxu0 0
    %784 = vmatprep.subr.bf16.mxu0 0
    %785 = vmatpush2.bf16.msra.mxu0 0
    %786 = vmatprep.subr.bf16.mxu0 0
    %787 = vmatpush2.bf16.msra.mxu0 0
    %788 = vmatprep.subr.bf16.mxu0 0
    %789 = vmatpush2.bf16.msra.mxu0 0
    %790 = vmatprep.subr.bf16.mxu0 0
    %791 = vmatpush2.bf16.msra.mxu0 0
    %792 = vmatprep.subr.bf16.mxu0 0
    %793 = vmatpush2.bf16.msra.mxu0 0
    %794 = vmatprep.mubr.bf16.mxu0 0
    %795 = vmatmul.mubr.bf16.gmra.mxu0 %v757
    %v796 = vpop.f32.mrf.mxu0
    %v797 = vadd.f32 0.0, %v796
    %v798 = vpop.f32.mrf.mxu0
    %v799 = vadd.f32 0.0, %v798
    %v800 = vpop.f32.mrf.mxu0
    %v801 = vadd.f32 0.0, %v800
    %v802 = vpop.f32.mrf.mxu0
    %v803 = vadd.f32 0.0, %v802
    %804 = vmatprep.mubr.bf16.mxu0 0
    %805 = vmatmul.mubr.bf16.gmra.mxu0 %v760
    %v806 = vpop.f32.mrf.mxu0
    %v807 = vadd.f32 0.0, %v806
    %v808 = vpop.f32.mrf.mxu0
    %v809 = vadd.f32 0.0, %v808
    %v810 = vpop.f32.mrf.mxu0
    %v811 = vadd.f32 0.0, %v810
    %v812 = vpop.f32.mrf.mxu0
    %v813 = vadd.f32 0.0, %v812
    %814 = vdwg.mxu0
    %v819 = vunpack.c.l.b16 %v456
    %v820 = vunpack.c.h.b16 %v456
    %v821 = vunpack.c.l.b16 %v457
    %v822 = vunpack.c.h.b16 %v457
    %v823 = vunpack.c.l.b16 %v458
    %v824 = vunpack.c.h.b16 %v458
    %v825 = vunpack.c.l.b16 %v459
    %v826 = vunpack.c.h.b16 %v459
    %v827 = vpack.c.b16 %v821, %v819
    %v828 = vpack.c.b16 %v822, %v820
    %v829 = vpack.c.b16 %v825, %v823
    %v830 = vpack.c.b16 %v826, %v824
    %v836 = vsel %vm230, %v454, 0
    %v839 = vsel %vm230, %v455, 0
    %841 = vmatprep.subr.bf16.mxu0 0
    %842 = vmatpush1.bf16.msra.mxu0 0
    %843 = vmatprep.subr.bf16.mxu0 0
    %844 = vmatpush1.bf16.msra.mxu0 0
    %845 = vmatprep.subr.bf16.mxu0 0
    %846 = vmatpush1.bf16.msra.mxu0 0
    %847 = vmatprep.subr.bf16.mxu0 0
    %848 = vmatpush1.bf16.msra.mxu0 0
    %849 = vmatprep.subr.bf16.mxu0 0
    %850 = vmatpush1.bf16.msra.mxu0 0
    %851 = vmatprep.subr.bf16.mxu0 0
    %852 = vmatpush1.bf16.msra.mxu0 0
    %853 = vmatprep.subr.bf16.mxu0 %v830
    %854 = vmatpush1.bf16.msra.mxu0 %v829
    %855 = vmatprep.subr.bf16.mxu0 %v828
    %856 = vmatpush1.bf16.msra.mxu0 %v827
    %857 = vmatprep.subr.bf16.mxu0 0
    %858 = vmatpush2.bf16.msra.mxu0 0
    %859 = vmatprep.subr.bf16.mxu0 0
    %860 = vmatpush2.bf16.msra.mxu0 0
    %861 = vmatprep.subr.bf16.mxu0 0
    %862 = vmatpush2.bf16.msra.mxu0 0
    %863 = vmatprep.subr.bf16.mxu0 0
    %864 = vmatpush2.bf16.msra.mxu0 0
    %865 = vmatprep.subr.bf16.mxu0 0
    %866 = vmatpush2.bf16.msra.mxu0 0
    %867 = vmatprep.subr.bf16.mxu0 0
    %868 = vmatpush2.bf16.msra.mxu0 0
    %869 = vmatprep.subr.bf16.mxu0 0
    %870 = vmatpush2.bf16.msra.mxu0 0
    %871 = vmatprep.subr.bf16.mxu0 0
    %872 = vmatpush2.bf16.msra.mxu0 0
    %873 = vmatprep.mubr.bf16.mxu0 0
    %874 = vmatmul.mubr.bf16.gmra.mxu0 %v836
    %v875 = vpop.f32.mrf.mxu0
    %v876 = vadd.f32 %v797, %v875
    %v877 = vpop.f32.mrf.mxu0
    %v878 = vadd.f32 %v799, %v877
    %v879 = vpop.f32.mrf.mxu0
    %v880 = vadd.f32 %v801, %v879
    %v881 = vpop.f32.mrf.mxu0
    %v882 = vadd.f32 %v803, %v881
    %883 = vmatprep.mubr.bf16.mxu0 0
    %884 = vmatmul.mubr.bf16.gmra.mxu0 %v839
    %v885 = vpop.f32.mrf.mxu0
    %v886 = vadd.f32 %v807, %v885
    %v887 = vpop.f32.mrf.mxu0
    %v888 = vadd.f32 %v809, %v887
    %v889 = vpop.f32.mrf.mxu0
    %v890 = vadd.f32 %v811, %v889
    %v891 = vpop.f32.mrf.mxu0
    %v892 = vadd.f32 %v813, %v891
    %893 = vdwg.mxu0
    %894 = vmatprep.subr.bf16.mxu0 0
    %895 = vmatpush1.bf16.msra.mxu0 0
    %896 = vmatprep.subr.bf16.mxu0 0
    %897 = vmatpush1.bf16.msra.mxu0 0
    %898 = vmatprep.subr.bf16.mxu0 0
    %899 = vmatpush1.bf16.msra.mxu0 0
    %900 = vmatprep.subr.bf16.mxu0 0
    %901 = vmatpush1.bf16.msra.mxu0 0
    %902 = vmatprep.subr.bf16.mxu0 0
    %903 = vmatpush1.bf16.msra.mxu0 0
    %904 = vmatprep.subr.bf16.mxu0 0
    %905 = vmatpush1.bf16.msra.mxu0 0
    %906 = vmatprep.subr.bf16.mxu0 0
    %907 = vmatpush1.bf16.msra.mxu0 %v730
    %908 = vmatprep.subr.bf16.mxu0 0
    %909 = vmatpush1.bf16.msra.mxu0 %v729
    %910 = vmatprep.subr.bf16.mxu0 0
    %911 = vmatpush2.bf16.msra.mxu0 0
    %912 = vmatprep.subr.bf16.mxu0 0
    %913 = vmatpush2.bf16.msra.mxu0 0
    %914 = vmatprep.subr.bf16.mxu0 0
    %915 = vmatpush2.bf16.msra.mxu0 0
    %916 = vmatprep.subr.bf16.mxu0 0
    %917 = vmatpush2.bf16.msra.mxu0 0
    %918 = vmatprep.subr.bf16.mxu0 0
    %919 = vmatpush2.bf16.msra.mxu0 0
    %920 = vmatprep.subr.bf16.mxu0 0
    %921 = vmatpush2.bf16.msra.mxu0 0
    %922 = vmatprep.subr.bf16.mxu0 0
    %923 = vmatpush2.bf16.msra.mxu0 0
    %924 = vmatprep.subr.bf16.mxu0 0
    %925 = vmatpush2.bf16.msra.mxu0 0
    %926 = vmatprep.mubr.bf16.mxu0 0
    %927 = vmatmul.mubr.bf16.gmra.mxu0 %v461
    %v928 = vpop.f32.mrf.mxu0
    %v929 = vadd.f32 0.0, %v928
    %v930 = vpop.f32.mrf.mxu0
    %v931 = vpop.f32.mrf.mxu0
    %v932 = vpop.f32.mrf.mxu0
    %933 = vdwg.mxu0
    %v934 = vpack.c.bf16 %v929, %v929
    %s935 = scalar_lea.vmem [#allocation11], 32
    %v936 = vld [vmem:[%s935] sm:$0xff]
    %v937 = vld [vmem:[%s935 + $0x8] sm:$0xff]
    %v938 = vld [vmem:[%s935 + $0x10] sm:$0xff]
    %v939 = vld [vmem:[%s935 + $0x18] sm:$0xff]
    %v944 = vunpack.c.l.b16 %v936
    %v945 = vunpack.c.h.b16 %v936
    %v946 = vunpack.c.l.b16 %v937
    %v947 = vunpack.c.h.b16 %v937
    %v948 = vunpack.c.l.b16 %v938
    %v949 = vunpack.c.h.b16 %v938
    %v950 = vunpack.c.l.b16 %v939
    %v951 = vunpack.c.h.b16 %v939
    %v952 = vpack.c.b16 %v946, %v944
    %v953 = vpack.c.b16 %v947, %v945
    %v954 = vpack.c.b16 %v950, %v948
    %v955 = vpack.c.b16 %v951, %v949
    %v961 = vsel %vm230, %v934, 0
    %963 = vmatprep.subr.bf16.mxu0 0
    %964 = vmatpush1.bf16.msra.mxu0 0
    %965 = vmatprep.subr.bf16.mxu0 0
    %966 = vmatpush1.bf16.msra.mxu0 0
    %967 = vmatprep.subr.bf16.mxu0 0
    %968 = vmatpush1.bf16.msra.mxu0 0
    %969 = vmatprep.subr.bf16.mxu0 0
    %970 = vmatpush1.bf16.msra.mxu0 0
    %971 = vmatprep.subr.bf16.mxu0 0
    %972 = vmatpush1.bf16.msra.mxu0 0
    %973 = vmatprep.subr.bf16.mxu0 0
    %974 = vmatpush1.bf16.msra.mxu0 0
    %975 = vmatprep.subr.bf16.mxu0 %v955
    %976 = vmatpush1.bf16.msra.mxu0 %v954
    %977 = vmatprep.subr.bf16.mxu0 %v953
    %978 = vmatpush1.bf16.msra.mxu0 %v952
    %979 = vmatprep.subr.bf16.mxu0 0
    %980 = vmatpush2.bf16.msra.mxu0 0
    %981 = vmatprep.subr.bf16.mxu0 0
    %982 = vmatpush2.bf16.msra.mxu0 0
    %983 = vmatprep.subr.bf16.mxu0 0
    %984 = vmatpush2.bf16.msra.mxu0 0
    %985 = vmatprep.subr.bf16.mxu0 0
    %986 = vmatpush2.bf16.msra.mxu0 0
    %987 = vmatprep.subr.bf16.mxu0 0
    %988 = vmatpush2.bf16.msra.mxu0 0
    %989 = vmatprep.subr.bf16.mxu0 0
    %990 = vmatpush2.bf16.msra.mxu0 0
    %991 = vmatprep.subr.bf16.mxu0 0
    %992 = vmatpush2.bf16.msra.mxu0 0
    %993 = vmatprep.subr.bf16.mxu0 0
    %994 = vmatpush2.bf16.msra.mxu0 0
    %995 = vmatprep.mubr.bf16.mxu0 0
    %996 = vmatmul.mubr.bf16.gmra.mxu0 %v961
    %v997 = vpop.f32.mrf.mxu0
    %v998 = vadd.f32 0.0, %v997
    %v999 = vpop.f32.mrf.mxu0
    %v1000 = vadd.f32 0.0, %v999
    %v1001 = vpop.f32.mrf.mxu0
    %v1002 = vpop.f32.mrf.mxu0
    %1003 = vdwg.mxu0
    %v1008 = vunpack.c.l.b16 %v504
    %v1009 = vunpack.c.h.b16 %v504
    %v1010 = vunpack.c.l.b16 %v505
    %v1011 = vunpack.c.h.b16 %v505
    %v1012 = vunpack.c.l.b16 %v506
    %v1013 = vunpack.c.h.b16 %v506
    %v1014 = vunpack.c.l.b16 %v507
    %v1015 = vunpack.c.h.b16 %v507
    %v1016 = vpack.c.b16 %v1010, %v1008
    %v1017 = vpack.c.b16 %v1011, %v1009
    %v1018 = vpack.c.b16 %v1014, %v1012
    %v1019 = vpack.c.b16 %v1015, %v1013
    %v1025 = vsel %vm230, %v503, 0
    %1027 = vmatprep.subr.bf16.mxu0 0
    %1028 = vmatpush1.bf16.msra.mxu0 0
    %1029 = vmatprep.subr.bf16.mxu0 0
    %1030 = vmatpush1.bf16.msra.mxu0 0
    %1031 = vmatprep.subr.bf16.mxu0 0
    %1032 = vmatpush1.bf16.msra.mxu0 0
    %1033 = vmatprep.subr.bf16.mxu0 0
    %1034 = vmatpush1.bf16.msra.mxu0 0
    %1035 = vmatprep.subr.bf16.mxu0 0
    %1036 = vmatpush1.bf16.msra.mxu0 0
    %1037 = vmatprep.subr.bf16.mxu0 0
    %1038 = vmatpush1.bf16.msra.mxu0 0
    %1039 = vmatprep.subr.bf16.mxu0 %v1019
    %1040 = vmatpush1.bf16.msra.mxu0 %v1018
    %1041 = vmatprep.subr.bf16.mxu0 %v1017
    %1042 = vmatpush1.bf16.msra.mxu0 %v1016
    %1043 = vmatprep.subr.bf16.mxu0 0
    %1044 = vmatpush2.bf16.msra.mxu0 0
    %1045 = vmatprep.subr.bf16.mxu0 0
    %1046 = vmatpush2.bf16.msra.mxu0 0
    %1047 = vmatprep.subr.bf16.mxu0 0
    %1048 = vmatpush2.bf16.msra.mxu0 0
    %1049 = vmatprep.subr.bf16.mxu0 0
    %1050 = vmatpush2.bf16.msra.mxu0 0
    %1051 = vmatprep.subr.bf16.mxu0 0
    %1052 = vmatpush2.bf16.msra.mxu0 0
    %1053 = vmatprep.subr.bf16.mxu0 0
    %1054 = vmatpush2.bf16.msra.mxu0 0
    %1055 = vmatprep.subr.bf16.mxu0 0
    %1056 = vmatpush2.bf16.msra.mxu0 0
    %1057 = vmatprep.subr.bf16.mxu0 0
    %1058 = vmatpush2.bf16.msra.mxu0 0
    %1059 = vmatprep.mubr.bf16.mxu0 0
    %1060 = vmatmul.mubr.bf16.gmra.mxu0 %v1025
    %v1061 = vpop.f32.mrf.mxu0
    %v1062 = vadd.f32 %v998, %v1061
    %v1063 = vpop.f32.mrf.mxu0
    %v1064 = vadd.f32 %v1000, %v1063
    %v1065 = vpop.f32.mrf.mxu0
    %v1066 = vpop.f32.mrf.mxu0
    %1067 = vdwg.mxu0
    %1068 = vmatprep.subr.bf16.mxu0 0
    %1069 = vmatpush1.bf16.msra.mxu0 0
    %1070 = vmatprep.subr.bf16.mxu0 0
    %1071 = vmatpush1.bf16.msra.mxu0 0
    %1072 = vmatprep.subr.bf16.mxu0 0
    %1073 = vmatpush1.bf16.msra.mxu0 0
    %1074 = vmatprep.subr.bf16.mxu0 0
    %1075 = vmatpush1.bf16.msra.mxu0 0
    %1076 = vmatprep.subr.bf16.mxu0 0
    %1077 = vmatpush1.bf16.msra.mxu0 0
    %1078 = vmatprep.subr.bf16.mxu0 0
    %1079 = vmatpush1.bf16.msra.mxu0 0
    %1080 = vmatprep.subr.bf16.mxu0 0
    %1081 = vmatpush1.bf16.msra.mxu0 %v730
    %1082 = vmatprep.subr.bf16.mxu0 0
    %1083 = vmatpush1.bf16.msra.mxu0 %v729
    %1084 = vmatprep.subr.bf16.mxu0 0
    %1085 = vmatpush2.bf16.msra.mxu0 0
    %1086 = vmatprep.subr.bf16.mxu0 0
    %1087 = vmatpush2.bf16.msra.mxu0 0
    %1088 = vmatprep.subr.bf16.mxu0 0
    %1089 = vmatpush2.bf16.msra.mxu0 0
    %1090 = vmatprep.subr.bf16.mxu0 0
    %1091 = vmatpush2.bf16.msra.mxu0 0
    %1092 = vmatprep.subr.bf16.mxu0 0
    %1093 = vmatpush2.bf16.msra.mxu0 0
    %1094 = vmatprep.subr.bf16.mxu0 0
    %1095 = vmatpush2.bf16.msra.mxu0 0
    %1096 = vmatprep.subr.bf16.mxu0 0
    %1097 = vmatpush2.bf16.msra.mxu0 0
    %1098 = vmatprep.subr.bf16.mxu0 0
    %1099 = vmatpush2.bf16.msra.mxu0 0
    %1100 = vmatprep.mubr.bf16.mxu0 0
    %1101 = vmatmul.mubr.bf16.gmra.mxu0 %v232
    %v1102 = vpop.f32.mrf.mxu0
    %v1103 = vadd.f32 0.0, %v1102
    %v1104 = vpop.f32.mrf.mxu0
    %v1105 = vpop.f32.mrf.mxu0
    %v1106 = vadd.f32 0.0, %v1105
    %v1107 = vpop.f32.mrf.mxu0
    %1108 = vmatprep.mubr.bf16.mxu0 0
    %1109 = vmatmul.mubr.bf16.gmra.mxu0 %v235
    %v1110 = vpop.f32.mrf.mxu0
    %v1111 = vadd.f32 0.0, %v1110
    %v1112 = vpop.f32.mrf.mxu0
    %v1113 = vpop.f32.mrf.mxu0
    %v1114 = vadd.f32 0.0, %v1113
    %v1115 = vpop.f32.mrf.mxu0
    %1116 = vdwg.mxu0
    %v1117 = vpack.c.bf16 %v1106, %v1103
    %v1118 = vpack.c.bf16 %v1114, %v1111
    %s1119 = scalar_lea.vmem [#allocation8], 32
    %v1120 = vld [vmem:[%s1119] sm:$0xf]
    %v1121 = vld [vmem:[%s1119 + $0x4] sm:$0xf]
    %v1122 = vld [vmem:[%s1119 + $0x8] sm:$0xf]
    %v1123 = vld [vmem:[%s1119 + $0xc] sm:$0xf]
    %s1124 = scalar_lea.vmem %s4, 2
    %v1125 = vld [vmem:[%s1124] sm:$0x1]
    %v1127 = vlaneseq
    %v1128 = vshrl.u32 %v1127, 7
    %v1129 = vsub.s32 0, %v1128
    %v1130 = vrot.slane %v1125, %v1129
    %v1136 = vunpack.c.l.b16 %v1120
    %v1137 = vunpack.c.l.b16 %v1121
    %v1138 = vunpack.c.l.b16 %v1122
    %v1139 = vunpack.c.l.b16 %v1123
    %v1140 = vpack.c.b16 %v1137, %v1136
    %v1141 = vpack.c.b16 %v1139, %v1138
    %v1145 = vsel %vm230, %v1117, 0
    %v1148 = vsel %vm230, %v1118, 0
    %1150 = vmatprep.subr.bf16.mxu0 0
    %1151 = vmatpush1.bf16.msra.mxu0 0
    %1152 = vmatprep.subr.bf16.mxu0 0
    %1153 = vmatpush1.bf16.msra.mxu0 0
    %1154 = vmatprep.subr.bf16.mxu0 0
    %1155 = vmatpush1.bf16.msra.mxu0 0
    %1156 = vmatprep.subr.bf16.mxu0 0
    %1157 = vmatpush1.bf16.msra.mxu0 0
    %1158 = vmatprep.subr.bf16.mxu0 0
    %1159 = vmatpush1.bf16.msra.mxu0 0
    %1160 = vmatprep.subr.bf16.mxu0 0
    %1161 = vmatpush1.bf16.msra.mxu0 0
    %1162 = vmatprep.subr.bf16.mxu0 0
    %1163 = vmatpush1.bf16.msra.mxu0 %v1141
    %1164 = vmatprep.subr.bf16.mxu0 0
    %1165 = vmatpush1.bf16.msra.mxu0 %v1140
    %1166 = vmatprep.subr.bf16.mxu0 0
    %1167 = vmatpush2.bf16.msra.mxu0 0
    %1168 = vmatprep.subr.bf16.mxu0 0
    %1169 = vmatpush2.bf16.msra.mxu0 0
    %1170 = vmatprep.subr.bf16.mxu0 0
    %1171 = vmatpush2.bf16.msra.mxu0 0
    %1172 = vmatprep.subr.bf16.mxu0 0
    %1173 = vmatpush2.bf16.msra.mxu0 0
    %1174 = vmatprep.subr.bf16.mxu0 0
    %1175 = vmatpush2.bf16.msra.mxu0 0
    %1176 = vmatprep.subr.bf16.mxu0 0
    %1177 = vmatpush2.bf16.msra.mxu0 0
    %1178 = vmatprep.subr.bf16.mxu0 0
    %1179 = vmatpush2.bf16.msra.mxu0 0
    %1180 = vmatprep.subr.bf16.mxu0 0
    %1181 = vmatpush2.bf16.msra.mxu0 0
    %1182 = vmatprep.mubr.bf16.mxu0 0
    %1183 = vmatmul.mubr.bf16.gmra.mxu0 %v1145
    %v1184 = vpop.f32.mrf.mxu0
    %v1185 = vadd.f32 %v1130, %v1184
    %v1186 = vpop.f32.mrf.mxu0
    %v1187 = vpop.f32.mrf.mxu0
    %v1188 = vadd.f32 %v1130, %v1187
    %v1189 = vpop.f32.mrf.mxu0
    %1190 = vmatprep.mubr.bf16.mxu0 0
    %1191 = vmatmul.mubr.bf16.gmra.mxu0 %v1148
    %v1192 = vpop.f32.mrf.mxu0
    %v1193 = vadd.f32 %v1130, %v1192
    %v1194 = vpop.f32.mrf.mxu0
    %v1195 = vpop.f32.mrf.mxu0
    %v1196 = vadd.f32 %v1130, %v1195
    %v1197 = vpop.f32.mrf.mxu0
    %1198 = vdwg.mxu0
    %v1199 = vmax.f32 %v1185, 0.0
    %v1200 = vmax.f32 %v1188, 0.0
    %v1201 = vmax.f32 %v1193, 0.0
    %v1202 = vmax.f32 %v1196, 0.0
    %v1203 = vpack.c.bf16 %v1200, %v1199
    %v1204 = vpack.c.bf16 %v1202, %v1201
    %s1205 = scalar_lea.vmem [#allocation10], 32
    %v1206 = vld [vmem:[%s1205] sm:$0xf]
    %v1207 = vld [vmem:[%s1205 + $0x4] sm:$0xf]
    %v1208 = vld [vmem:[%s1205 + $0x8] sm:$0xf]
    %v1209 = vld [vmem:[%s1205 + $0xc] sm:$0xf]
    %s1210 = scalar_lea.vmem %s6, 2
    %v1211 = vld [vmem:[%s1210] sm:$0x1]
    %v1213 = vlaneseq
    %v1214 = vshrl.u32 %v1213, 7
    %v1215 = vsub.s32 0, %v1214
    %v1216 = vrot.slane %v1211, %v1215
    %v1222 = vunpack.c.l.b16 %v1206
    %v1223 = vunpack.c.l.b16 %v1207
    %v1224 = vunpack.c.l.b16 %v1208
    %v1225 = vunpack.c.l.b16 %v1209
    %v1226 = vpack.c.b16 %v1223, %v1222
    %v1227 = vpack.c.b16 %v1225, %v1224
    %v1231 = vsel %vm230, %v1203, 0
    %v1234 = vsel %vm230, %v1204, 0
    %1236 = vmatprep.subr.bf16.mxu0 0
    %1237 = vmatpush1.bf16.msra.mxu0 0
    %1238 = vmatprep.subr.bf16.mxu0 0
    %1239 = vmatpush1.bf16.msra.mxu0 0
    %1240 = vmatprep.subr.bf16.mxu0 0
    %1241 = vmatpush1.bf16.msra.mxu0 0
    %1242 = vmatprep.subr.bf16.mxu0 0
    %1243 = vmatpush1.bf16.msra.mxu0 0
    %1244 = vmatprep.subr.bf16.mxu0 0
    %1245 = vmatpush1.bf16.msra.mxu0 0
    %1246 = vmatprep.subr.bf16.mxu0 0
    %1247 = vmatpush1.bf16.msra.mxu0 0
    %1248 = vmatprep.subr.bf16.mxu0 0
    %1249 = vmatpush1.bf16.msra.mxu0 %v1227
    %1250 = vmatprep.subr.bf16.mxu0 0
    %1251 = vmatpush1.bf16.msra.mxu0 %v1226
    %1252 = vmatprep.subr.bf16.mxu0 0
    %1253 = vmatpush2.bf16.msra.mxu0 0
    %1254 = vmatprep.subr.bf16.mxu0 0
    %1255 = vmatpush2.bf16.msra.mxu0 0
    %1256 = vmatprep.subr.bf16.mxu0 0
    %1257 = vmatpush2.bf16.msra.mxu0 0
    %1258 = vmatprep.subr.bf16.mxu0 0
    %1259 = vmatpush2.bf16.msra.mxu0 0
    %1260 = vmatprep.subr.bf16.mxu0 0
    %1261 = vmatpush2.bf16.msra.mxu0 0
    %1262 = vmatprep.subr.bf16.mxu0 0
    %1263 = vmatpush2.bf16.msra.mxu0 0
    %1264 = vmatprep.subr.bf16.mxu0 0
    %1265 = vmatpush2.bf16.msra.mxu0 0
    %1266 = vmatprep.subr.bf16.mxu0 0
    %1267 = vmatpush2.bf16.msra.mxu0 0
    %1268 = vmatprep.mubr.bf16.mxu0 0
    %1269 = vmatmul.mubr.bf16.gmra.mxu0 %v1231
    %v1270 = vpop.f32.mrf.mxu0
    %v1271 = vadd.f32 %v1216, %v1270
    %v1272 = vpop.f32.mrf.mxu0
    %v1273 = vpop.f32.mrf.mxu0
    %v1274 = vadd.f32 %v1216, %v1273
    %v1275 = vpop.f32.mrf.mxu0
    %1276 = vmatprep.mubr.bf16.mxu0 0
    %1277 = vmatmul.mubr.bf16.gmra.mxu0 %v1234
    %v1278 = vpop.f32.mrf.mxu0
    %v1279 = vadd.f32 %v1216, %v1278
    %v1280 = vpop.f32.mrf.mxu0
    %v1281 = vpop.f32.mrf.mxu0
    %v1282 = vadd.f32 %v1216, %v1281
    %v1283 = vpop.f32.mrf.mxu0
    %1284 = vdwg.mxu0
    %v1285 = vmax.f32 %v1271, 0.0
    %v1286 = vmax.f32 %v1274, 0.0
    %v1287 = vmax.f32 %v1279, 0.0
    %v1288 = vmax.f32 %v1282, 0.0
    %v1289 = vpack.c.bf16 %v1286, %v1285
    %v1290 = vpack.c.bf16 %v1288, %v1287
    %s1291 = scalar_lea.vmem [#allocation16], 64
    %v1292 = vld [vmem:[%s1291] sm:$0xff]
    %v1293 = vld [vmem:[%s1291 + $0x8] sm:$0xff]
    %v1294 = vld [vmem:[%s1291 + $0x10] sm:$0xff]
    %v1295 = vld [vmem:[%s1291 + $0x18] sm:$0xff]
    %v1300 = vunpack.c.l.b16 %v1292
    %v1301 = vunpack.c.h.b16 %v1292
    %v1302 = vunpack.c.l.b16 %v1293
    %v1303 = vunpack.c.h.b16 %v1293
    %v1304 = vunpack.c.l.b16 %v1294
    %v1305 = vunpack.c.h.b16 %v1294
    %v1306 = vunpack.c.l.b16 %v1295
    %v1307 = vunpack.c.h.b16 %v1295
    %v1308 = vpack.c.b16 %v1302, %v1300
    %v1309 = vpack.c.b16 %v1303, %v1301
    %v1310 = vpack.c.b16 %v1306, %v1304
    %v1311 = vpack.c.b16 %v1307, %v1305
    %v1317 = vsel %vm230, %v1289, 0
    %v1320 = vsel %vm230, %v1290, 0
    %1322 = vmatprep.subr.bf16.mxu0 0
    %1323 = vmatpush1.bf16.msra.mxu0 0
    %1324 = vmatprep.subr.bf16.mxu0 0
    %1325 = vmatpush1.bf16.msra.mxu0 0
    %1326 = vmatprep.subr.bf16.mxu0 0
    %1327 = vmatpush1.bf16.msra.mxu0 0
    %1328 = vmatprep.subr.bf16.mxu0 0
    %1329 = vmatpush1.bf16.msra.mxu0 0
    %1330 = vmatprep.subr.bf16.mxu0 0
    %1331 = vmatpush1.bf16.msra.mxu0 0
    %1332 = vmatprep.subr.bf16.mxu0 0
    %1333 = vmatpush1.bf16.msra.mxu0 0
    %1334 = vmatprep.subr.bf16.mxu0 %v1311
    %1335 = vmatpush1.bf16.msra.mxu0 %v1310
    %1336 = vmatprep.subr.bf16.mxu0 %v1309
    %1337 = vmatpush1.bf16.msra.mxu0 %v1308
    %1338 = vmatprep.subr.bf16.mxu0 0
    %1339 = vmatpush2.bf16.msra.mxu0 0
    %1340 = vmatprep.subr.bf16.mxu0 0
    %1341 = vmatpush2.bf16.msra.mxu0 0
    %1342 = vmatprep.subr.bf16.mxu0 0
    %1343 = vmatpush2.bf16.msra.mxu0 0
    %1344 = vmatprep.subr.bf16.mxu0 0
    %1345 = vmatpush2.bf16.msra.mxu0 0
    %1346 = vmatprep.subr.bf16.mxu0 0
    %1347 = vmatpush2.bf16.msra.mxu0 0
    %1348 = vmatprep.subr.bf16.mxu0 0
    %1349 = vmatpush2.bf16.msra.mxu0 0
    %1350 = vmatprep.subr.bf16.mxu0 0
    %1351 = vmatpush2.bf16.msra.mxu0 0
    %1352 = vmatprep.subr.bf16.mxu0 0
    %1353 = vmatpush2.bf16.msra.mxu0 0
    %1354 = vmatprep.mubr.bf16.mxu0 0
    %1355 = vmatmul.mubr.bf16.gmra.mxu0 %v1317
    %v1356 = vpop.f32.mrf.mxu0
    %v1357 = vadd.f32 0.0, %v1356
    %v1358 = vpop.f32.mrf.mxu0
    %v1359 = vadd.f32 0.0, %v1358
    %v1360 = vpop.f32.mrf.mxu0
    %v1361 = vadd.f32 0.0, %v1360
    %v1362 = vpop.f32.mrf.mxu0
    %v1363 = vadd.f32 0.0, %v1362
    %1364 = vmatprep.mubr.bf16.mxu0 0
    %1365 = vmatmul.mubr.bf16.gmra.mxu0 %v1320
    %v1366 = vpop.f32.mrf.mxu0
    %v1367 = vadd.f32 0.0, %v1366
    %v1368 = vpop.f32.mrf.mxu0
    %v1369 = vadd.f32 0.0, %v1368
    %v1370 = vpop.f32.mrf.mxu0
    %v1371 = vadd.f32 0.0, %v1370
    %v1372 = vpop.f32.mrf.mxu0
    %v1373 = vadd.f32 0.0, %v1372
    %1374 = vdwg.mxu0
    %v1375 = vadd.f32 %v876, %v1357
    %v1376 = vadd.f32 %v878, %v1359
    %v1377 = vadd.f32 %v880, %v1361
    %v1378 = vadd.f32 %v882, %v1363
    %v1379 = vadd.f32 %v886, %v1367
    %v1380 = vadd.f32 %v888, %v1369
    %v1381 = vadd.f32 %v890, %v1371
    %v1382 = vadd.f32 %v892, %v1373
    %1383 = vmatprep.subr.bf16.mxu0 0
    %1384 = vmatpush1.bf16.msra.mxu0 0
    %1385 = vmatprep.subr.bf16.mxu0 0
    %1386 = vmatpush1.bf16.msra.mxu0 0
    %1387 = vmatprep.subr.bf16.mxu0 0
    %1388 = vmatpush1.bf16.msra.mxu0 0
    %1389 = vmatprep.subr.bf16.mxu0 0
    %1390 = vmatpush1.bf16.msra.mxu0 0
    %1391 = vmatprep.subr.bf16.mxu0 0
    %1392 = vmatpush1.bf16.msra.mxu0 0
    %1393 = vmatprep.subr.bf16.mxu0 0
    %1394 = vmatpush1.bf16.msra.mxu0 0
    %1395 = vmatprep.subr.bf16.mxu0 0
    %1396 = vmatpush1.bf16.msra.mxu0 %v1290
    %1397 = vmatprep.subr.bf16.mxu0 0
    %1398 = vmatpush1.bf16.msra.mxu0 %v1289
    %1399 = vmatprep.subr.bf16.mxu0 0
    %1400 = vmatpush2.bf16.msra.mxu0 0
    %1401 = vmatprep.subr.bf16.mxu0 0
    %1402 = vmatpush2.bf16.msra.mxu0 0
    %1403 = vmatprep.subr.bf16.mxu0 0
    %1404 = vmatpush2.bf16.msra.mxu0 0
    %1405 = vmatprep.subr.bf16.mxu0 0
    %1406 = vmatpush2.bf16.msra.mxu0 0
    %1407 = vmatprep.subr.bf16.mxu0 0
    %1408 = vmatpush2.bf16.msra.mxu0 0
    %1409 = vmatprep.subr.bf16.mxu0 0
    %1410 = vmatpush2.bf16.msra.mxu0 0
    %1411 = vmatprep.subr.bf16.mxu0 0
    %1412 = vmatpush2.bf16.msra.mxu0 0
    %1413 = vmatprep.subr.bf16.mxu0 0
    %1414 = vmatpush2.bf16.msra.mxu0 0
    %1415 = vmatprep.mubr.bf16.mxu0 0
    %1416 = vmatmul.mubr.bf16.gmra.mxu0 %v461
    %v1417 = vpop.f32.mrf.mxu0
    %v1418 = vadd.f32 0.0, %v1417
    %v1419 = vpop.f32.mrf.mxu0
    %v1420 = vpop.f32.mrf.mxu0
    %v1421 = vpop.f32.mrf.mxu0
    %1422 = vdwg.mxu0
    %v1423 = vpack.c.bf16 %v1418, %v1418
    %s1424 = scalar_lea.vmem [#allocation11], 64
    %v1425 = vld [vmem:[%s1424] sm:$0xff]
    %v1426 = vld [vmem:[%s1424 + $0x8] sm:$0xff]
    %v1427 = vld [vmem:[%s1424 + $0x10] sm:$0xff]
    %v1428 = vld [vmem:[%s1424 + $0x18] sm:$0xff]
    %v1433 = vunpack.c.l.b16 %v1425
    %v1434 = vunpack.c.h.b16 %v1425
    %v1435 = vunpack.c.l.b16 %v1426
    %v1436 = vunpack.c.h.b16 %v1426
    %v1437 = vunpack.c.l.b16 %v1427
    %v1438 = vunpack.c.h.b16 %v1427
    %v1439 = vunpack.c.l.b16 %v1428
    %v1440 = vunpack.c.h.b16 %v1428
    %v1441 = vpack.c.b16 %v1435, %v1433
    %v1442 = vpack.c.b16 %v1436, %v1434
    %v1443 = vpack.c.b16 %v1439, %v1437
    %v1444 = vpack.c.b16 %v1440, %v1438
    %v1450 = vsel %vm230, %v1423, 0
    %1452 = vmatprep.subr.bf16.mxu0 0
    %1453 = vmatpush1.bf16.msra.mxu0 0
    %1454 = vmatprep.subr.bf16.mxu0 0
    %1455 = vmatpush1.bf16.msra.mxu0 0
    %1456 = vmatprep.subr.bf16.mxu0 0
    %1457 = vmatpush1.bf16.msra.mxu0 0
    %1458 = vmatprep.subr.bf16.mxu0 0
    %1459 = vmatpush1.bf16.msra.mxu0 0
    %1460 = vmatprep.subr.bf16.mxu0 0
    %1461 = vmatpush1.bf16.msra.mxu0 0
    %1462 = vmatprep.subr.bf16.mxu0 0
    %1463 = vmatpush1.bf16.msra.mxu0 0
    %1464 = vmatprep.subr.bf16.mxu0 %v1444
    %1465 = vmatpush1.bf16.msra.mxu0 %v1443
    %1466 = vmatprep.subr.bf16.mxu0 %v1442
    %1467 = vmatpush1.bf16.msra.mxu0 %v1441
    %1468 = vmatprep.subr.bf16.mxu0 0
    %1469 = vmatpush2.bf16.msra.mxu0 0
    %1470 = vmatprep.subr.bf16.mxu0 0
    %1471 = vmatpush2.bf16.msra.mxu0 0
    %1472 = vmatprep.subr.bf16.mxu0 0
    %1473 = vmatpush2.bf16.msra.mxu0 0
    %1474 = vmatprep.subr.bf16.mxu0 0
    %1475 = vmatpush2.bf16.msra.mxu0 0
    %1476 = vmatprep.subr.bf16.mxu0 0
    %1477 = vmatpush2.bf16.msra.mxu0 0
    %1478 = vmatprep.subr.bf16.mxu0 0
    %1479 = vmatpush2.bf16.msra.mxu0 0
    %1480 = vmatprep.subr.bf16.mxu0 0
    %1481 = vmatpush2.bf16.msra.mxu0 0
    %1482 = vmatprep.subr.bf16.mxu0 0
    %1483 = vmatpush2.bf16.msra.mxu0 0
    %1484 = vmatprep.mubr.bf16.mxu0 0
    %1485 = vmatmul.mubr.bf16.gmra.mxu0 %v1450
    %v1486 = vpop.f32.mrf.mxu0
    %v1487 = vadd.f32 0.0, %v1486
    %v1488 = vpop.f32.mrf.mxu0
    %v1489 = vadd.f32 0.0, %v1488
    %v1490 = vpop.f32.mrf.mxu0
    %v1491 = vpop.f32.mrf.mxu0
    %1492 = vdwg.mxu0
    %v1493 = vadd.f32 %v1062, %v1487
    %v1494 = vadd.f32 %v1064, %v1489
    %1495 = vmatprep.subr.bf16.mxu0 0
    %1496 = vmatpush1.bf16.msra.mxu0 0
    %1497 = vmatprep.subr.bf16.mxu0 0
    %1498 = vmatpush1.bf16.msra.mxu0 0
    %1499 = vmatprep.subr.bf16.mxu0 0
    %1500 = vmatpush1.bf16.msra.mxu0 0
    %1501 = vmatprep.subr.bf16.mxu0 0
    %1502 = vmatpush1.bf16.msra.mxu0 0
    %1503 = vmatprep.subr.bf16.mxu0 0
    %1504 = vmatpush1.bf16.msra.mxu0 0
    %1505 = vmatprep.subr.bf16.mxu0 0
    %1506 = vmatpush1.bf16.msra.mxu0 0
    %1507 = vmatprep.subr.bf16.mxu0 0
    %1508 = vmatpush1.bf16.msra.mxu0 %v1290
    %1509 = vmatprep.subr.bf16.mxu0 0
    %1510 = vmatpush1.bf16.msra.mxu0 %v1289
    %1511 = vmatprep.subr.bf16.mxu0 0
    %1512 = vmatpush2.bf16.msra.mxu0 0
    %1513 = vmatprep.subr.bf16.mxu0 0
    %1514 = vmatpush2.bf16.msra.mxu0 0
    %1515 = vmatprep.subr.bf16.mxu0 0
    %1516 = vmatpush2.bf16.msra.mxu0 0
    %1517 = vmatprep.subr.bf16.mxu0 0
    %1518 = vmatpush2.bf16.msra.mxu0 0
    %1519 = vmatprep.subr.bf16.mxu0 0
    %1520 = vmatpush2.bf16.msra.mxu0 0
    %1521 = vmatprep.subr.bf16.mxu0 0
    %1522 = vmatpush2.bf16.msra.mxu0 0
    %1523 = vmatprep.subr.bf16.mxu0 0
    %1524 = vmatpush2.bf16.msra.mxu0 0
    %1525 = vmatprep.subr.bf16.mxu0 0
    %1526 = vmatpush2.bf16.msra.mxu0 0
    %1527 = vmatprep.mubr.bf16.mxu0 0
    %1528 = vmatmul.mubr.bf16.gmra.mxu0 %v232
    %v1529 = vpop.f32.mrf.mxu0
    %v1530 = vadd.f32 0.0, %v1529
    %v1531 = vpop.f32.mrf.mxu0
    %v1532 = vpop.f32.mrf.mxu0
    %v1533 = vadd.f32 0.0, %v1532
    %v1534 = vpop.f32.mrf.mxu0
    %1535 = vmatprep.mubr.bf16.mxu0 0
    %1536 = vmatmul.mubr.bf16.gmra.mxu0 %v235
    %v1537 = vpop.f32.mrf.mxu0
    %v1538 = vadd.f32 0.0, %v1537
    %v1539 = vpop.f32.mrf.mxu0
    %v1540 = vpop.f32.mrf.mxu0
    %v1541 = vadd.f32 0.0, %v1540
    %v1542 = vpop.f32.mrf.mxu0
    %1543 = vdwg.mxu0
    %v1544 = vpack.c.bf16 %v1533, %v1530
    %v1545 = vpack.c.bf16 %v1541, %v1538
    %s1546 = scalar_lea.vmem [#allocation8], 48
    %v1547 = vld [vmem:[%s1546] sm:$0xf]
    %v1548 = vld [vmem:[%s1546 + $0x4] sm:$0xf]
    %v1549 = vld [vmem:[%s1546 + $0x8] sm:$0xf]
    %v1550 = vld [vmem:[%s1546 + $0xc] sm:$0xf]
    %s1551 = scalar_lea.vmem %s4, 3
    %v1552 = vld [vmem:[%s1551] sm:$0x1]
    %v1554 = vlaneseq
    %v1555 = vshrl.u32 %v1554, 7
    %v1556 = vsub.s32 0, %v1555
    %v1557 = vrot.slane %v1552, %v1556
    %v1563 = vunpack.c.l.b16 %v1547
    %v1564 = vunpack.c.l.b16 %v1548
    %v1565 = vunpack.c.l.b16 %v1549
    %v1566 = vunpack.c.l.b16 %v1550
    %v1567 = vpack.c.b16 %v1564, %v1563
    %v1568 = vpack.c.b16 %v1566, %v1565
    %v1572 = vsel %vm230, %v1544, 0
    %v1575 = vsel %vm230, %v1545, 0
    %1577 = vmatprep.subr.bf16.mxu0 0
    %1578 = vmatpush1.bf16.msra.mxu0 0
    %1579 = vmatprep.subr.bf16.mxu0 0
    %1580 = vmatpush1.bf16.msra.mxu0 0
    %1581 = vmatprep.subr.bf16.mxu0 0
    %1582 = vmatpush1.bf16.msra.mxu0 0
    %1583 = vmatprep.subr.bf16.mxu0 0
    %1584 = vmatpush1.bf16.msra.mxu0 0
    %1585 = vmatprep.subr.bf16.mxu0 0
    %1586 = vmatpush1.bf16.msra.mxu0 0
    %1587 = vmatprep.subr.bf16.mxu0 0
    %1588 = vmatpush1.bf16.msra.mxu0 0
    %1589 = vmatprep.subr.bf16.mxu0 0
    %1590 = vmatpush1.bf16.msra.mxu0 %v1568
    %1591 = vmatprep.subr.bf16.mxu0 0
    %1592 = vmatpush1.bf16.msra.mxu0 %v1567
    %1593 = vmatprep.subr.bf16.mxu0 0
    %1594 = vmatpush2.bf16.msra.mxu0 0
    %1595 = vmatprep.subr.bf16.mxu0 0
    %1596 = vmatpush2.bf16.msra.mxu0 0
    %1597 = vmatprep.subr.bf16.mxu0 0
    %1598 = vmatpush2.bf16.msra.mxu0 0
    %1599 = vmatprep.subr.bf16.mxu0 0
    %1600 = vmatpush2.bf16.msra.mxu0 0
    %1601 = vmatprep.subr.bf16.mxu0 0
    %1602 = vmatpush2.bf16.msra.mxu0 0
    %1603 = vmatprep.subr.bf16.mxu0 0
    %1604 = vmatpush2.bf16.msra.mxu0 0
    %1605 = vmatprep.subr.bf16.mxu0 0
    %1606 = vmatpush2.bf16.msra.mxu0 0
    %1607 = vmatprep.subr.bf16.mxu0 0
    %1608 = vmatpush2.bf16.msra.mxu0 0
    %1609 = vmatprep.mubr.bf16.mxu0 0
    %1610 = vmatmul.mubr.bf16.gmra.mxu0 %v1572
    %v1611 = vpop.f32.mrf.mxu0
    %v1612 = vadd.f32 %v1557, %v1611
    %v1613 = vpop.f32.mrf.mxu0
    %v1614 = vpop.f32.mrf.mxu0
    %v1615 = vadd.f32 %v1557, %v1614
    %v1616 = vpop.f32.mrf.mxu0
    %1617 = vmatprep.mubr.bf16.mxu0 0
    %1618 = vmatmul.mubr.bf16.gmra.mxu0 %v1575
    %v1619 = vpop.f32.mrf.mxu0
    %v1620 = vadd.f32 %v1557, %v1619
    %v1621 = vpop.f32.mrf.mxu0
    %v1622 = vpop.f32.mrf.mxu0
    %v1623 = vadd.f32 %v1557, %v1622
    %v1624 = vpop.f32.mrf.mxu0
    %1625 = vdwg.mxu0
    %v1626 = vmax.f32 %v1612, 0.0
    %v1627 = vmax.f32 %v1615, 0.0
    %v1628 = vmax.f32 %v1620, 0.0
    %v1629 = vmax.f32 %v1623, 0.0
    %v1630 = vpack.c.bf16 %v1627, %v1626
    %v1631 = vpack.c.bf16 %v1629, %v1628
    %s1632 = scalar_lea.vmem [#allocation10], 48
    %v1633 = vld [vmem:[%s1632] sm:$0xf]
    %v1634 = vld [vmem:[%s1632 + $0x4] sm:$0xf]
    %v1635 = vld [vmem:[%s1632 + $0x8] sm:$0xf]
    %v1636 = vld [vmem:[%s1632 + $0xc] sm:$0xf]
    %s1637 = scalar_lea.vmem %s6, 3
    %v1638 = vld [vmem:[%s1637] sm:$0x1]
    %v1640 = vlaneseq
    %v1641 = vshrl.u32 %v1640, 7
    %v1642 = vsub.s32 0, %v1641
    %v1643 = vrot.slane %v1638, %v1642
    %v1649 = vunpack.c.l.b16 %v1633
    %v1650 = vunpack.c.l.b16 %v1634
    %v1651 = vunpack.c.l.b16 %v1635
    %v1652 = vunpack.c.l.b16 %v1636
    %v1653 = vpack.c.b16 %v1650, %v1649
    %v1654 = vpack.c.b16 %v1652, %v1651
    %v1658 = vsel %vm230, %v1630, 0
    %v1661 = vsel %vm230, %v1631, 0
    %1663 = vmatprep.subr.bf16.mxu0 0
    %1664 = vmatpush1.bf16.msra.mxu0 0
    %1665 = vmatprep.subr.bf16.mxu0 0
    %1666 = vmatpush1.bf16.msra.mxu0 0
    %1667 = vmatprep.subr.bf16.mxu0 0
    %1668 = vmatpush1.bf16.msra.mxu0 0
    %1669 = vmatprep.subr.bf16.mxu0 0
    %1670 = vmatpush1.bf16.msra.mxu0 0
    %1671 = vmatprep.subr.bf16.mxu0 0
    %1672 = vmatpush1.bf16.msra.mxu0 0
    %1673 = vmatprep.subr.bf16.mxu0 0
    %1674 = vmatpush1.bf16.msra.mxu0 0
    %1675 = vmatprep.subr.bf16.mxu0 0
    %1676 = vmatpush1.bf16.msra.mxu0 %v1654
    %1677 = vmatprep.subr.bf16.mxu0 0
    %1678 = vmatpush1.bf16.msra.mxu0 %v1653
    %1679 = vmatprep.subr.bf16.mxu0 0
    %1680 = vmatpush2.bf16.msra.mxu0 0
    %1681 = vmatprep.subr.bf16.mxu0 0
    %1682 = vmatpush2.bf16.msra.mxu0 0
    %1683 = vmatprep.subr.bf16.mxu0 0
    %1684 = vmatpush2.bf16.msra.mxu0 0
    %1685 = vmatprep.subr.bf16.mxu0 0
    %1686 = vmatpush2.bf16.msra.mxu0 0
    %1687 = vmatprep.subr.bf16.mxu0 0
    %1688 = vmatpush2.bf16.msra.mxu0 0
    %1689 = vmatprep.subr.bf16.mxu0 0
    %1690 = vmatpush2.bf16.msra.mxu0 0
    %1691 = vmatprep.subr.bf16.mxu0 0
    %1692 = vmatpush2.bf16.msra.mxu0 0
    %1693 = vmatprep.subr.bf16.mxu0 0
    %1694 = vmatpush2.bf16.msra.mxu0 0
    %1695 = vmatprep.mubr.bf16.mxu0 0
    %1696 = vmatmul.mubr.bf16.gmra.mxu0 %v1658
    %v1697 = vpop.f32.mrf.mxu0
    %v1698 = vadd.f32 %v1643, %v1697
    %v1699 = vpop.f32.mrf.mxu0
    %v1700 = vpop.f32.mrf.mxu0
    %v1701 = vadd.f32 %v1643, %v1700
    %v1702 = vpop.f32.mrf.mxu0
    %1703 = vmatprep.mubr.bf16.mxu0 0
    %1704 = vmatmul.mubr.bf16.gmra.mxu0 %v1661
    %v1705 = vpop.f32.mrf.mxu0
    %v1706 = vadd.f32 %v1643, %v1705
    %v1707 = vpop.f32.mrf.mxu0
    %v1708 = vpop.f32.mrf.mxu0
    %v1709 = vadd.f32 %v1643, %v1708
    %v1710 = vpop.f32.mrf.mxu0
    %1711 = vdwg.mxu0
    %v1712 = vmax.f32 %v1698, 0.0
    %v1713 = vmax.f32 %v1701, 0.0
    %v1714 = vmax.f32 %v1706, 0.0
    %v1715 = vmax.f32 %v1709, 0.0
    %v1716 = vpack.c.bf16 %v1713, %v1712
    %v1717 = vpack.c.bf16 %v1715, %v1714
    %s1718 = scalar_lea.vmem [#allocation16], 96
    %v1719 = vld [vmem:[%s1718] sm:$0xff]
    %v1720 = vld [vmem:[%s1718 + $0x8] sm:$0xff]
    %v1721 = vld [vmem:[%s1718 + $0x10] sm:$0xff]
    %v1722 = vld [vmem:[%s1718 + $0x18] sm:$0xff]
    %v1727 = vunpack.c.l.b16 %v1719
    %v1728 = vunpack.c.h.b16 %v1719
    %v1729 = vunpack.c.l.b16 %v1720
    %v1730 = vunpack.c.h.b16 %v1720
    %v1731 = vunpack.c.l.b16 %v1721
    %v1732 = vunpack.c.h.b16 %v1721
    %v1733 = vunpack.c.l.b16 %v1722
    %v1734 = vunpack.c.h.b16 %v1722
    %v1735 = vpack.c.b16 %v1729, %v1727
    %v1736 = vpack.c.b16 %v1730, %v1728
    %v1737 = vpack.c.b16 %v1733, %v1731
    %v1738 = vpack.c.b16 %v1734, %v1732
    %v1744 = vsel %vm230, %v1716, 0
    %v1747 = vsel %vm230, %v1717, 0
    %1749 = vmatprep.subr.bf16.mxu0 0
    %1750 = vmatpush1.bf16.msra.mxu0 0
    %1751 = vmatprep.subr.bf16.mxu0 0
    %1752 = vmatpush1.bf16.msra.mxu0 0
    %1753 = vmatprep.subr.bf16.mxu0 0
    %1754 = vmatpush1.bf16.msra.mxu0 0
    %1755 = vmatprep.subr.bf16.mxu0 0
    %1756 = vmatpush1.bf16.msra.mxu0 0
    %1757 = vmatprep.subr.bf16.mxu0 0
    %1758 = vmatpush1.bf16.msra.mxu0 0
    %1759 = vmatprep.subr.bf16.mxu0 0
    %1760 = vmatpush1.bf16.msra.mxu0 0
    %1761 = vmatprep.subr.bf16.mxu0 %v1738
    %1762 = vmatpush1.bf16.msra.mxu0 %v1737
    %1763 = vmatprep.subr.bf16.mxu0 %v1736
    %1764 = vmatpush1.bf16.msra.mxu0 %v1735
    %1765 = vmatprep.subr.bf16.mxu0 0
    %1766 = vmatpush2.bf16.msra.mxu0 0
    %1767 = vmatprep.subr.bf16.mxu0 0
    %1768 = vmatpush2.bf16.msra.mxu0 0
    %1769 = vmatprep.subr.bf16.mxu0 0
    %1770 = vmatpush2.bf16.msra.mxu0 0
    %1771 = vmatprep.subr.bf16.mxu0 0
    %1772 = vmatpush2.bf16.msra.mxu0 0
    %1773 = vmatprep.subr.bf16.mxu0 0
    %1774 = vmatpush2.bf16.msra.mxu0 0
    %1775 = vmatprep.subr.bf16.mxu0 0
    %1776 = vmatpush2.bf16.msra.mxu0 0
    %1777 = vmatprep.subr.bf16.mxu0 0
    %1778 = vmatpush2.bf16.msra.mxu0 0
    %1779 = vmatprep.subr.bf16.mxu0 0
    %1780 = vmatpush2.bf16.msra.mxu0 0
    %1781 = vmatprep.mubr.bf16.mxu0 0
    %1782 = vmatmul.mubr.bf16.gmra.mxu0 %v1744
    %v1783 = vpop.f32.mrf.mxu0
    %v1784 = vadd.f32 0.0, %v1783
    %v1785 = vpop.f32.mrf.mxu0
    %v1786 = vadd.f32 0.0, %v1785
    %v1787 = vpop.f32.mrf.mxu0
    %v1788 = vadd.f32 0.0, %v1787
    %v1789 = vpop.f32.mrf.mxu0
    %v1790 = vadd.f32 0.0, %v1789
    %1791 = vmatprep.mubr.bf16.mxu0 0
    %1792 = vmatmul.mubr.bf16.gmra.mxu0 %v1747
    %v1793 = vpop.f32.mrf.mxu0
    %v1794 = vadd.f32 0.0, %v1793
    %v1795 = vpop.f32.mrf.mxu0
    %v1796 = vadd.f32 0.0, %v1795
    %v1797 = vpop.f32.mrf.mxu0
    %v1798 = vadd.f32 0.0, %v1797
    %v1799 = vpop.f32.mrf.mxu0
    %v1800 = vadd.f32 0.0, %v1799
    %1801 = vdwg.mxu0
    %v1802 = vadd.f32 %v1375, %v1784
    %v1803 = vadd.f32 %v1376, %v1786
    %v1804 = vadd.f32 %v1377, %v1788
    %v1805 = vadd.f32 %v1378, %v1790
    %v1806 = vadd.f32 %v1379, %v1794
    %v1807 = vadd.f32 %v1380, %v1796
    %v1808 = vadd.f32 %v1381, %v1798
    %v1809 = vadd.f32 %v1382, %v1800
    %1810 = vmatprep.subr.bf16.mxu0 0
    %1811 = vmatpush1.bf16.msra.mxu0 0
    %1812 = vmatprep.subr.bf16.mxu0 0
    %1813 = vmatpush1.bf16.msra.mxu0 0
    %1814 = vmatprep.subr.bf16.mxu0 0
    %1815 = vmatpush1.bf16.msra.mxu0 0
    %1816 = vmatprep.subr.bf16.mxu0 0
    %1817 = vmatpush1.bf16.msra.mxu0 0
    %1818 = vmatprep.subr.bf16.mxu0 0
    %1819 = vmatpush1.bf16.msra.mxu0 0
    %1820 = vmatprep.subr.bf16.mxu0 0
    %1821 = vmatpush1.bf16.msra.mxu0 0
    %1822 = vmatprep.subr.bf16.mxu0 0
    %1823 = vmatpush1.bf16.msra.mxu0 %v1717
    %1824 = vmatprep.subr.bf16.mxu0 0
    %1825 = vmatpush1.bf16.msra.mxu0 %v1716
    %1826 = vmatprep.subr.bf16.mxu0 0
    %1827 = vmatpush2.bf16.msra.mxu0 0
    %1828 = vmatprep.subr.bf16.mxu0 0
    %1829 = vmatpush2.bf16.msra.mxu0 0
    %1830 = vmatprep.subr.bf16.mxu0 0
    %1831 = vmatpush2.bf16.msra.mxu0 0
    %1832 = vmatprep.subr.bf16.mxu0 0
    %1833 = vmatpush2.bf16.msra.mxu0 0
    %1834 = vmatprep.subr.bf16.mxu0 0
    %1835 = vmatpush2.bf16.msra.mxu0 0
    %1836 = vmatprep.subr.bf16.mxu0 0
    %1837 = vmatpush2.bf16.msra.mxu0 0
    %1838 = vmatprep.subr.bf16.mxu0 0
    %1839 = vmatpush2.bf16.msra.mxu0 0
    %1840 = vmatprep.subr.bf16.mxu0 0
    %1841 = vmatpush2.bf16.msra.mxu0 0
    %1842 = vmatprep.mubr.bf16.mxu0 0
    %1843 = vmatmul.mubr.bf16.gmra.mxu0 %v461
    %v1844 = vpop.f32.mrf.mxu0
    %v1845 = vadd.f32 0.0, %v1844
    %v1846 = vpop.f32.mrf.mxu0
    %v1847 = vpop.f32.mrf.mxu0
    %v1848 = vpop.f32.mrf.mxu0
    %1849 = vdwg.mxu0
    %v1850 = vpack.c.bf16 %v1845, %v1845
    %s1851 = scalar_lea.vmem [#allocation11], 96
    %v1852 = vld [vmem:[%s1851] sm:$0xff]
    %v1853 = vld [vmem:[%s1851 + $0x8] sm:$0xff]
    %v1854 = vld [vmem:[%s1851 + $0x10] sm:$0xff]
    %v1855 = vld [vmem:[%s1851 + $0x18] sm:$0xff]
    %v1860 = vunpack.c.l.b16 %v1852
    %v1861 = vunpack.c.h.b16 %v1852
    %v1862 = vunpack.c.l.b16 %v1853
    %v1863 = vunpack.c.h.b16 %v1853
    %v1864 = vunpack.c.l.b16 %v1854
    %v1865 = vunpack.c.h.b16 %v1854
    %v1866 = vunpack.c.l.b16 %v1855
    %v1867 = vunpack.c.h.b16 %v1855
    %v1868 = vpack.c.b16 %v1862, %v1860
    %v1869 = vpack.c.b16 %v1863, %v1861
    %v1870 = vpack.c.b16 %v1866, %v1864
    %v1871 = vpack.c.b16 %v1867, %v1865
    %v1877 = vsel %vm230, %v1850, 0
    %1879 = vmatprep.subr.bf16.mxu0 0
    %1880 = vmatpush1.bf16.msra.mxu0 0
    %1881 = vmatprep.subr.bf16.mxu0 0
    %1882 = vmatpush1.bf16.msra.mxu0 0
    %1883 = vmatprep.subr.bf16.mxu0 0
    %1884 = vmatpush1.bf16.msra.mxu0 0
    %1885 = vmatprep.subr.bf16.mxu0 0
    %1886 = vmatpush1.bf16.msra.mxu0 0
    %1887 = vmatprep.subr.bf16.mxu0 0
    %1888 = vmatpush1.bf16.msra.mxu0 0
    %1889 = vmatprep.subr.bf16.mxu0 0
    %1890 = vmatpush1.bf16.msra.mxu0 0
    %1891 = vmatprep.subr.bf16.mxu0 %v1871
    %1892 = vmatpush1.bf16.msra.mxu0 %v1870
    %1893 = vmatprep.subr.bf16.mxu0 %v1869
    %1894 = vmatpush1.bf16.msra.mxu0 %v1868
    %1895 = vmatprep.subr.bf16.mxu0 0
    %1896 = vmatpush2.bf16.msra.mxu0 0
    %1897 = vmatprep.subr.bf16.mxu0 0
    %1898 = vmatpush2.bf16.msra.mxu0 0
    %1899 = vmatprep.subr.bf16.mxu0 0
    %1900 = vmatpush2.bf16.msra.mxu0 0
    %1901 = vmatprep.subr.bf16.mxu0 0
    %1902 = vmatpush2.bf16.msra.mxu0 0
    %1903 = vmatprep.subr.bf16.mxu0 0
    %1904 = vmatpush2.bf16.msra.mxu0 0
    %1905 = vmatprep.subr.bf16.mxu0 0
    %1906 = vmatpush2.bf16.msra.mxu0 0
    %1907 = vmatprep.subr.bf16.mxu0 0
    %1908 = vmatpush2.bf16.msra.mxu0 0
    %1909 = vmatprep.subr.bf16.mxu0 0
    %1910 = vmatpush2.bf16.msra.mxu0 0
    %1911 = vmatprep.mubr.bf16.mxu0 0
    %1912 = vmatmul.mubr.bf16.gmra.mxu0 %v1877
    %v1913 = vpop.f32.mrf.mxu0
    %v1914 = vadd.f32 0.0, %v1913
    %v1915 = vpop.f32.mrf.mxu0
    %v1916 = vadd.f32 0.0, %v1915
    %v1917 = vpop.f32.mrf.mxu0
    %v1918 = vpop.f32.mrf.mxu0
    %1919 = vdwg.mxu0
    %v1920 = vadd.f32 %v1493, %v1914
    %v1921 = vadd.f32 %v1494, %v1916
    %v1922 = vld [vmem:[%s10] sm:$0x1]
    %v1924 = vlaneseq
    %v1925 = vshrl.u32 %v1924, 7
    %v1926 = vsub.s32 0, %v1925
    %v1927 = vrot.slane %v1922, %v1926
    %v1929 = vadd.f32 %v1920, %v1927
    %v1930 = vmax.f32 %v1929, 0.0
    %v1931 = vpack.c.bf16 %v1930, %v1930
    %v1932 = vld [vmem:[#allocation13] sm:$0xf]
    %v1933 = vld [vmem:[#allocation13 + $0x4] sm:$0xf]
    %v1934 = vld [vmem:[#allocation13 + $0x8] sm:$0xf]
    %v1935 = vld [vmem:[#allocation13 + $0xc] sm:$0xf]
    %v1936 = vld [vmem:[#allocation13 + $0x10] sm:$0xf]
    %v1937 = vld [vmem:[#allocation13 + $0x14] sm:$0xf]
    %v1938 = vld [vmem:[#allocation13 + $0x18] sm:$0xf]
    %v1939 = vld [vmem:[#allocation13 + $0x1c] sm:$0xf]
    %v1940 = vld [vmem:[#allocation13 + $0x20] sm:$0xf]
    %v1941 = vld [vmem:[#allocation13 + $0x24] sm:$0xf]
    %v1942 = vld [vmem:[#allocation13 + $0x28] sm:$0xf]
    %v1943 = vld [vmem:[#allocation13 + $0x2c] sm:$0xf]
    %v1944 = vld [vmem:[#allocation13 + $0x30] sm:$0xf]
    %v1945 = vld [vmem:[#allocation13 + $0x34] sm:$0xf]
    %v1946 = vld [vmem:[#allocation13 + $0x38] sm:$0xf]
    %v1947 = vld [vmem:[#allocation13 + $0x3c] sm:$0xf]
    %s1948 = scalar_lea.vmem %s10, 1
    %v1949 = vld [vmem:[%s1948] sm:$0x1]
    %v1951 = vlaneseq
    %v1952 = vshrl.u32 %v1951, 7
    %v1953 = vsub.s32 0, %v1952
    %v1954 = vrot.slane %v1949, %v1953
    %v1972 = vunpack.c.l.b16 %v1932
    %v1973 = vunpack.c.l.b16 %v1933
    %v1974 = vunpack.c.l.b16 %v1934
    %v1975 = vunpack.c.l.b16 %v1935
    %v1976 = vunpack.c.l.b16 %v1936
    %v1977 = vunpack.c.l.b16 %v1937
    %v1978 = vunpack.c.l.b16 %v1938
    %v1979 = vunpack.c.l.b16 %v1939
    %v1980 = vunpack.c.l.b16 %v1940
    %v1981 = vunpack.c.l.b16 %v1941
    %v1982 = vunpack.c.l.b16 %v1942
    %v1983 = vunpack.c.l.b16 %v1943
    %v1984 = vunpack.c.l.b16 %v1944
    %v1985 = vunpack.c.l.b16 %v1945
    %v1986 = vunpack.c.l.b16 %v1946
    %v1987 = vunpack.c.l.b16 %v1947
    %v1988 = vpack.c.b16 %v1973, %v1972
    %v1989 = vpack.c.b16 %v1975, %v1974
    %v1990 = vpack.c.b16 %v1977, %v1976
    %v1991 = vpack.c.b16 %v1979, %v1978
    %v1992 = vpack.c.b16 %v1981, %v1980
    %v1993 = vpack.c.b16 %v1983, %v1982
    %v1994 = vpack.c.b16 %v1985, %v1984
    %v1995 = vpack.c.b16 %v1987, %v1986
    %2004 = vmatprep.subr.bf16.mxu0 0
    %2005 = vmatpush1.bf16.msra.mxu0 %v1995
    %2006 = vmatprep.subr.bf16.mxu0 0
    %2007 = vmatpush1.bf16.msra.mxu0 %v1994
    %2008 = vmatprep.subr.bf16.mxu0 0
    %2009 = vmatpush1.bf16.msra.mxu0 %v1993
    %2010 = vmatprep.subr.bf16.mxu0 0
    %2011 = vmatpush1.bf16.msra.mxu0 %v1992
    %2012 = vmatprep.subr.bf16.mxu0 0
    %2013 = vmatpush1.bf16.msra.mxu0 %v1991
    %2014 = vmatprep.subr.bf16.mxu0 0
    %2015 = vmatpush1.bf16.msra.mxu0 %v1990
    %2016 = vmatprep.subr.bf16.mxu0 0
    %2017 = vmatpush1.bf16.msra.mxu0 %v1989
    %2018 = vmatprep.subr.bf16.mxu0 0
    %2019 = vmatpush1.bf16.msra.mxu0 %v1988
    %2020 = vmatprep.subr.bf16.mxu0 0
    %2021 = vmatpush2.bf16.msra.mxu0 0
    %2022 = vmatprep.subr.bf16.mxu0 0
    %2023 = vmatpush2.bf16.msra.mxu0 0
    %2024 = vmatprep.subr.bf16.mxu0 0
    %2025 = vmatpush2.bf16.msra.mxu0 0
    %2026 = vmatprep.subr.bf16.mxu0 0
    %2027 = vmatpush2.bf16.msra.mxu0 0
    %2028 = vmatprep.subr.bf16.mxu0 0
    %2029 = vmatpush2.bf16.msra.mxu0 0
    %2030 = vmatprep.subr.bf16.mxu0 0
    %2031 = vmatpush2.bf16.msra.mxu0 0
    %2032 = vmatprep.subr.bf16.mxu0 0
    %2033 = vmatpush2.bf16.msra.mxu0 0
    %2034 = vmatprep.subr.bf16.mxu0 0
    %2035 = vmatpush2.bf16.msra.mxu0 0
    %2036 = vmatprep.mubr.bf16.mxu0 0
    %2037 = vmatmul.mubr.bf16.gmra.mxu0 %v1931
    %v2038 = vpop.f32.mrf.mxu0
    %v2039 = vadd.f32 %v1954, %v2038
    %v2040 = vpop.f32.mrf.mxu0
    %v2041 = vpop.f32.mrf.mxu0
    %v2042 = vpop.f32.mrf.mxu0
    %2043 = vdwg.mxu0
    %v2044 = vmax.f32 %v2039, 0.0
    %v2045 = vpack.c.bf16 %v2044, %v2044
    %v2046 = vld [vmem:[#allocation14] sm:$0xf]
    %v2047 = vld [vmem:[#allocation14 + $0x4] sm:$0xf]
    %v2048 = vld [vmem:[#allocation14 + $0x8] sm:$0xf]
    %v2049 = vld [vmem:[#allocation14 + $0xc] sm:$0xf]
    %v2050 = vld [vmem:[#allocation14 + $0x10] sm:$0xf]
    %v2051 = vld [vmem:[#allocation14 + $0x14] sm:$0xf]
    %v2052 = vld [vmem:[#allocation14 + $0x18] sm:$0xf]
    %v2053 = vld [vmem:[#allocation14 + $0x1c] sm:$0xf]
    %v2054 = vld [vmem:[#allocation14 + $0x20] sm:$0xf]
    %v2055 = vld [vmem:[#allocation14 + $0x24] sm:$0xf]
    %v2056 = vld [vmem:[#allocation14 + $0x28] sm:$0xf]
    %v2057 = vld [vmem:[#allocation14 + $0x2c] sm:$0xf]
    %v2058 = vld [vmem:[#allocation14 + $0x30] sm:$0xf]
    %v2059 = vld [vmem:[#allocation14 + $0x34] sm:$0xf]
    %v2060 = vld [vmem:[#allocation14 + $0x38] sm:$0xf]
    %v2061 = vld [vmem:[#allocation14 + $0x3c] sm:$0xf]
    %s2062 = scalar_lea.vmem %s10, 2
    %v2063 = vld [vmem:[%s2062] sm:$0x1]
    %v2065 = vlaneseq
    %v2066 = vshrl.u32 %v2065, 7
    %v2067 = vsub.s32 0, %v2066
    %v2068 = vrot.slane %v2063, %v2067
    %v2086 = vunpack.c.l.b16 %v2046
    %v2087 = vunpack.c.l.b16 %v2047
    %v2088 = vunpack.c.l.b16 %v2048
    %v2089 = vunpack.c.l.b16 %v2049
    %v2090 = vunpack.c.l.b16 %v2050
    %v2091 = vunpack.c.l.b16 %v2051
    %v2092 = vunpack.c.l.b16 %v2052
    %v2093 = vunpack.c.l.b16 %v2053
    %v2094 = vunpack.c.l.b16 %v2054
    %v2095 = vunpack.c.l.b16 %v2055
    %v2096 = vunpack.c.l.b16 %v2056
    %v2097 = vunpack.c.l.b16 %v2057
    %v2098 = vunpack.c.l.b16 %v2058
    %v2099 = vunpack.c.l.b16 %v2059
    %v2100 = vunpack.c.l.b16 %v2060
    %v2101 = vunpack.c.l.b16 %v2061
    %v2102 = vpack.c.b16 %v2087, %v2086
    %v2103 = vpack.c.b16 %v2089, %v2088
    %v2104 = vpack.c.b16 %v2091, %v2090
    %v2105 = vpack.c.b16 %v2093, %v2092
    %v2106 = vpack.c.b16 %v2095, %v2094
    %v2107 = vpack.c.b16 %v2097, %v2096
    %v2108 = vpack.c.b16 %v2099, %v2098
    %v2109 = vpack.c.b16 %v2101, %v2100
    %2118 = vmatprep.subr.bf16.mxu0 0
    %2119 = vmatpush1.bf16.msra.mxu0 %v2109
    %2120 = vmatprep.subr.bf16.mxu0 0
    %2121 = vmatpush1.bf16.msra.mxu0 %v2108
    %2122 = vmatprep.subr.bf16.mxu0 0
    %2123 = vmatpush1.bf16.msra.mxu0 %v2107
    %2124 = vmatprep.subr.bf16.mxu0 0
    %2125 = vmatpush1.bf16.msra.mxu0 %v2106
    %2126 = vmatprep.subr.bf16.mxu0 0
    %2127 = vmatpush1.bf16.msra.mxu0 %v2105
    %2128 = vmatprep.subr.bf16.mxu0 0
    %2129 = vmatpush1.bf16.msra.mxu0 %v2104
    %2130 = vmatprep.subr.bf16.mxu0 0
    %2131 = vmatpush1.bf16.msra.mxu0 %v2103
    %2132 = vmatprep.subr.bf16.mxu0 0
    %2133 = vmatpush1.bf16.msra.mxu0 %v2102
    %2134 = vmatprep.subr.bf16.mxu0 0
    %2135 = vmatpush2.bf16.msra.mxu0 0
    %2136 = vmatprep.subr.bf16.mxu0 0
    %2137 = vmatpush2.bf16.msra.mxu0 0
    %2138 = vmatprep.subr.bf16.mxu0 0
    %2139 = vmatpush2.bf16.msra.mxu0 0
    %2140 = vmatprep.subr.bf16.mxu0 0
    %2141 = vmatpush2.bf16.msra.mxu0 0
    %2142 = vmatprep.subr.bf16.mxu0 0
    %2143 = vmatpush2.bf16.msra.mxu0 0
    %2144 = vmatprep.subr.bf16.mxu0 0
    %2145 = vmatpush2.bf16.msra.mxu0 0
    %2146 = vmatprep.subr.bf16.mxu0 0
    %2147 = vmatpush2.bf16.msra.mxu0 0
    %2148 = vmatprep.subr.bf16.mxu0 0
    %2149 = vmatpush2.bf16.msra.mxu0 0
    %2150 = vmatprep.mubr.bf16.mxu0 0
    %2151 = vmatmul.mubr.bf16.gmra.mxu0 %v2045
    %v2152 = vpop.f32.mrf.mxu0
    %v2153 = vadd.f32 %v2068, %v2152
    %v2154 = vpop.f32.mrf.mxu0
    %v2155 = vpop.f32.mrf.mxu0
    %v2156 = vpop.f32.mrf.mxu0
    %2157 = vdwg.mxu0
    %v2158 = vmax.f32 %v2153, 0.0
    %v2159 = vadd.f32 %v2158, %v1921
    %s2160 = scalar_lea.vmem %s10, 3
    %v2161 = vld [vmem:[%s2160] sm:$0x1]
    %v2163 = vlaneseq
    %v2164 = vshrl.u32 %v2163, 7
    %v2165 = vsub.s32 0, %v2164
    %v2166 = vrot.slane %v2161, %v2165
    %v2168 = vadd.f32 %v2159, %v2166
    %v2169 = vld [vmem:[%s14] sm:$0x1]
    %v2171 = vlaneseq
    %v2172 = vshrl.u32 %v2171, 7
    %v2173 = vsub.s32 0, %v2172
    %v2174 = vrot.slane %v2169, %v2173
    %v2176 = vadd.f32 %v1802, %v2174
    %v2177 = vadd.f32 %v1804, %v2174
    %v2178 = vadd.f32 %v1806, %v2174
    %v2179 = vadd.f32 %v1808, %v2174
    %v2180 = vmax.f32 %v2176, 0.0
    %v2181 = vmax.f32 %v2177, 0.0
    %v2182 = vmax.f32 %v2178, 0.0
    %v2183 = vmax.f32 %v2179, 0.0
    %v2184 = vpack.c.bf16 %v2181, %v2180
    %v2185 = vpack.c.bf16 %v2183, %v2182
    %v2186 = vld [vmem:[#allocation17] sm:$0xf]
    %v2187 = vld [vmem:[#allocation17 + $0x4] sm:$0xf]
    %v2188 = vld [vmem:[#allocation17 + $0x8] sm:$0xf]
    %v2189 = vld [vmem:[#allocation17 + $0xc] sm:$0xf]
    %v2190 = vld [vmem:[#allocation17 + $0x10] sm:$0xf]
    %v2191 = vld [vmem:[#allocation17 + $0x14] sm:$0xf]
    %v2192 = vld [vmem:[#allocation17 + $0x18] sm:$0xf]
    %v2193 = vld [vmem:[#allocation17 + $0x1c] sm:$0xf]
    %v2194 = vld [vmem:[#allocation17 + $0x20] sm:$0xf]
    %v2195 = vld [vmem:[#allocation17 + $0x24] sm:$0xf]
    %v2196 = vld [vmem:[#allocation17 + $0x28] sm:$0xf]
    %v2197 = vld [vmem:[#allocation17 + $0x2c] sm:$0xf]
    %v2198 = vld [vmem:[#allocation17 + $0x30] sm:$0xf]
    %v2199 = vld [vmem:[#allocation17 + $0x34] sm:$0xf]
    %v2200 = vld [vmem:[#allocation17 + $0x38] sm:$0xf]
    %v2201 = vld [vmem:[#allocation17 + $0x3c] sm:$0xf]
    %s2202 = scalar_lea.vmem %s14, 1
    %v2203 = vld [vmem:[%s2202] sm:$0x1]
    %v2205 = vlaneseq
    %v2206 = vshrl.u32 %v2205, 7
    %v2207 = vsub.s32 0, %v2206
    %v2208 = vrot.slane %v2203, %v2207
    %v2226 = vunpack.c.l.b16 %v2186
    %v2227 = vunpack.c.l.b16 %v2187
    %v2228 = vunpack.c.l.b16 %v2188
    %v2229 = vunpack.c.l.b16 %v2189
    %v2230 = vunpack.c.l.b16 %v2190
    %v2231 = vunpack.c.l.b16 %v2191
    %v2232 = vunpack.c.l.b16 %v2192
    %v2233 = vunpack.c.l.b16 %v2193
    %v2234 = vunpack.c.l.b16 %v2194
    %v2235 = vunpack.c.l.b16 %v2195
    %v2236 = vunpack.c.l.b16 %v2196
    %v2237 = vunpack.c.l.b16 %v2197
    %v2238 = vunpack.c.l.b16 %v2198
    %v2239 = vunpack.c.l.b16 %v2199
    %v2240 = vunpack.c.l.b16 %v2200
    %v2241 = vunpack.c.l.b16 %v2201
    %v2242 = vpack.c.b16 %v2227, %v2226
    %v2243 = vpack.c.b16 %v2229, %v2228
    %v2244 = vpack.c.b16 %v2231, %v2230
    %v2245 = vpack.c.b16 %v2233, %v2232
    %v2246 = vpack.c.b16 %v2235, %v2234
    %v2247 = vpack.c.b16 %v2237, %v2236
    %v2248 = vpack.c.b16 %v2239, %v2238
    %v2249 = vpack.c.b16 %v2241, %v2240
    %2258 = vmatprep.subr.bf16.mxu0 0
    %2259 = vmatpush1.bf16.msra.mxu0 %v2249
    %2260 = vmatprep.subr.bf16.mxu0 0
    %2261 = vmatpush1.bf16.msra.mxu0 %v2248
    %2262 = vmatprep.subr.bf16.mxu0 0
    %2263 = vmatpush1.bf16.msra.mxu0 %v2247
    %2264 = vmatprep.subr.bf16.mxu0 0
    %2265 = vmatpush1.bf16.msra.mxu0 %v2246
    %2266 = vmatprep.subr.bf16.mxu0 0
    %2267 = vmatpush1.bf16.msra.mxu0 %v2245
    %2268 = vmatprep.subr.bf16.mxu0 0
    %2269 = vmatpush1.bf16.msra.mxu0 %v2244
    %2270 = vmatprep.subr.bf16.mxu0 0
    %2271 = vmatpush1.bf16.msra.mxu0 %v2243
    %2272 = vmatprep.subr.bf16.mxu0 0
    %2273 = vmatpush1.bf16.msra.mxu0 %v2242
    %2274 = vmatprep.subr.bf16.mxu0 0
    %2275 = vmatpush2.bf16.msra.mxu0 0
    %2276 = vmatprep.subr.bf16.mxu0 0
    %2277 = vmatpush2.bf16.msra.mxu0 0
    %2278 = vmatprep.subr.bf16.mxu0 0
    %2279 = vmatpush2.bf16.msra.mxu0 0
    %2280 = vmatprep.subr.bf16.mxu0 0
    %2281 = vmatpush2.bf16.msra.mxu0 0
    %2282 = vmatprep.subr.bf16.mxu0 0
    %2283 = vmatpush2.bf16.msra.mxu0 0
    %2284 = vmatprep.subr.bf16.mxu0 0
    %2285 = vmatpush2.bf16.msra.mxu0 0
    %2286 = vmatprep.subr.bf16.mxu0 0
    %2287 = vmatpush2.bf16.msra.mxu0 0
    %2288 = vmatprep.subr.bf16.mxu0 0
    %2289 = vmatpush2.bf16.msra.mxu0 0
    %2290 = vmatprep.mubr.bf16.mxu0 0
    %2291 = vmatmul.mubr.bf16.gmra.mxu0 %v2184
    %v2292 = vpop.f32.mrf.mxu0
    %v2293 = vadd.f32 %v2208, %v2292
    %v2294 = vpop.f32.mrf.mxu0
    %v2295 = vpop.f32.mrf.mxu0
    %v2296 = vadd.f32 %v2208, %v2295
    %v2297 = vpop.f32.mrf.mxu0
    %2298 = vmatprep.mubr.bf16.mxu0 0
    %2299 = vmatmul.mubr.bf16.gmra.mxu0 %v2185
    %v2300 = vpop.f32.mrf.mxu0
    %v2301 = vadd.f32 %v2208, %v2300
    %v2302 = vpop.f32.mrf.mxu0
    %v2303 = vpop.f32.mrf.mxu0
    %v2304 = vadd.f32 %v2208, %v2303
    %v2305 = vpop.f32.mrf.mxu0
    %2306 = vdwg.mxu0
    %v2307 = vmax.f32 %v2293, 0.0
    %v2308 = vmax.f32 %v2296, 0.0
    %v2309 = vmax.f32 %v2301, 0.0
    %v2310 = vmax.f32 %v2304, 0.0
    %v2311 = vpack.c.bf16 %v2308, %v2307
    %v2312 = vpack.c.bf16 %v2310, %v2309
    %v2313 = vld [vmem:[#allocation19] sm:$0xf]
    %v2314 = vld [vmem:[#allocation19 + $0x4] sm:$0xf]
    %v2315 = vld [vmem:[#allocation19 + $0x8] sm:$0xf]
    %v2316 = vld [vmem:[#allocation19 + $0xc] sm:$0xf]
    %v2317 = vld [vmem:[#allocation19 + $0x10] sm:$0xf]
    %v2318 = vld [vmem:[#allocation19 + $0x14] sm:$0xf]
    %v2319 = vld [vmem:[#allocation19 + $0x18] sm:$0xf]
    %v2320 = vld [vmem:[#allocation19 + $0x1c] sm:$0xf]
    %v2321 = vld [vmem:[#allocation19 + $0x20] sm:$0xf]
    %v2322 = vld [vmem:[#allocation19 + $0x24] sm:$0xf]
    %v2323 = vld [vmem:[#allocation19 + $0x28] sm:$0xf]
    %v2324 = vld [vmem:[#allocation19 + $0x2c] sm:$0xf]
    %v2325 = vld [vmem:[#allocation19 + $0x30] sm:$0xf]
    %v2326 = vld [vmem:[#allocation19 + $0x34] sm:$0xf]
    %v2327 = vld [vmem:[#allocation19 + $0x38] sm:$0xf]
    %v2328 = vld [vmem:[#allocation19 + $0x3c] sm:$0xf]
    %s2329 = scalar_lea.vmem %s14, 2
    %v2330 = vld [vmem:[%s2329] sm:$0x1]
    %v2332 = vlaneseq
    %v2333 = vshrl.u32 %v2332, 7
    %v2334 = vsub.s32 0, %v2333
    %v2335 = vrot.slane %v2330, %v2334
    %v2353 = vunpack.c.l.b16 %v2313
    %v2354 = vunpack.c.l.b16 %v2314
    %v2355 = vunpack.c.l.b16 %v2315
    %v2356 = vunpack.c.l.b16 %v2316
    %v2357 = vunpack.c.l.b16 %v2317
    %v2358 = vunpack.c.l.b16 %v2318
    %v2359 = vunpack.c.l.b16 %v2319
    %v2360 = vunpack.c.l.b16 %v2320
    %v2361 = vunpack.c.l.b16 %v2321
    %v2362 = vunpack.c.l.b16 %v2322
    %v2363 = vunpack.c.l.b16 %v2323
    %v2364 = vunpack.c.l.b16 %v2324
    %v2365 = vunpack.c.l.b16 %v2325
    %v2366 = vunpack.c.l.b16 %v2326
    %v2367 = vunpack.c.l.b16 %v2327
    %v2368 = vunpack.c.l.b16 %v2328
    %v2369 = vpack.c.b16 %v2354, %v2353
    %v2370 = vpack.c.b16 %v2356, %v2355
    %v2371 = vpack.c.b16 %v2358, %v2357
    %v2372 = vpack.c.b16 %v2360, %v2359
    %v2373 = vpack.c.b16 %v2362, %v2361
    %v2374 = vpack.c.b16 %v2364, %v2363
    %v2375 = vpack.c.b16 %v2366, %v2365
    %v2376 = vpack.c.b16 %v2368, %v2367
    %2385 = vmatprep.subr.bf16.mxu0 0
    %2386 = vmatpush1.bf16.msra.mxu0 %v2376
    %2387 = vmatprep.subr.bf16.mxu0 0
    %2388 = vmatpush1.bf16.msra.mxu0 %v2375
    %2389 = vmatprep.subr.bf16.mxu0 0
    %2390 = vmatpush1.bf16.msra.mxu0 %v2374
    %2391 = vmatprep.subr.bf16.mxu0 0
    %2392 = vmatpush1.bf16.msra.mxu0 %v2373
    %2393 = vmatprep.subr.bf16.mxu0 0
    %2394 = vmatpush1.bf16.msra.mxu0 %v2372
    %2395 = vmatprep.subr.bf16.mxu0 0
    %2396 = vmatpush1.bf16.msra.mxu0 %v2371
    %2397 = vmatprep.subr.bf16.mxu0 0
    %2398 = vmatpush1.bf16.msra.mxu0 %v2370
    %2399 = vmatprep.subr.bf16.mxu0 0
    %2400 = vmatpush1.bf16.msra.mxu0 %v2369
    %2401 = vmatprep.subr.bf16.mxu0 0
    %2402 = vmatpush2.bf16.msra.mxu0 0
    %2403 = vmatprep.subr.bf16.mxu0 0
    %2404 = vmatpush2.bf16.msra.mxu0 0
    %2405 = vmatprep.subr.bf16.mxu0 0
    %2406 = vmatpush2.bf16.msra.mxu0 0
    %2407 = vmatprep.subr.bf16.mxu0 0
    %2408 = vmatpush2.bf16.msra.mxu0 0
    %2409 = vmatprep.subr.bf16.mxu0 0
    %2410 = vmatpush2.bf16.msra.mxu0 0
    %2411 = vmatprep.subr.bf16.mxu0 0
    %2412 = vmatpush2.bf16.msra.mxu0 0
    %2413 = vmatprep.subr.bf16.mxu0 0
    %2414 = vmatpush2.bf16.msra.mxu0 0
    %2415 = vmatprep.subr.bf16.mxu0 0
    %2416 = vmatpush2.bf16.msra.mxu0 0
    %2417 = vmatprep.mubr.bf16.mxu0 0
    %2418 = vmatmul.mubr.bf16.gmra.mxu0 %v2311
    %v2419 = vpop.f32.mrf.mxu0
    %v2420 = vadd.f32 %v2335, %v2419
    %v2421 = vpop.f32.mrf.mxu0
    %v2422 = vpop.f32.mrf.mxu0
    %v2423 = vadd.f32 %v2335, %v2422
    %v2424 = vpop.f32.mrf.mxu0
    %2425 = vmatprep.mubr.bf16.mxu0 0
    %2426 = vmatmul.mubr.bf16.gmra.mxu0 %v2312
    %v2427 = vpop.f32.mrf.mxu0
    %v2428 = vadd.f32 %v2335, %v2427
    %v2429 = vpop.f32.mrf.mxu0
    %v2430 = vpop.f32.mrf.mxu0
    %v2431 = vadd.f32 %v2335, %v2430
    %v2432 = vpop.f32.mrf.mxu0
    %2433 = vdwg.mxu0
    %v2434 = vmax.f32 %v2420, 0.0
    %v2435 = vmax.f32 %v2423, 0.0
    %v2436 = vmax.f32 %v2428, 0.0
    %v2437 = vmax.f32 %v2431, 0.0
    %v2438 = vadd.f32 %v2434, %v1803
    %v2439 = vadd.f32 %v2435, %v1805
    %v2440 = vadd.f32 %v2436, %v1807
    %v2441 = vadd.f32 %v2437, %v1809
    %s2442 = scalar_lea.vmem %s14, 3
    %v2443 = vld [vmem:[%s2442] sm:$0x1]
    %v2445 = vlaneseq
    %v2446 = vshrl.u32 %v2445, 7
    %v2447 = vsub.s32 0, %v2446
    %v2448 = vrot.slane %v2443, %v2447
    %v2450 = vadd.f32 %v2438, %v2448
    %v2451 = vadd.f32 %v2439, %v2448
    %v2452 = vadd.f32 %v2440, %v2448
    %v2453 = vadd.f32 %v2441, %v2448
    %v2454 = vpack.c.bf16 %v2168, %v2168
    %v2455 = vpack.c.bf16 %v2451, %v2450
    %v2456 = vpack.c.bf16 %v2453, %v2452
    %2457 = vmatprep.subr.bf16.mxu0 0
    %2458 = vmatpush1.bf16.xpose.msra.mxu0 0
    %2459 = vmatprep.subr.bf16.mxu0 0
    %2460 = vmatpush1.bf16.xpose.msra.mxu0 0
    %2461 = vmatprep.subr.bf16.mxu0 0
    %2462 = vmatpush1.bf16.xpose.msra.mxu0 0
    %2463 = vmatprep.subr.bf16.mxu0 0
    %2464 = vmatpush1.bf16.xpose.msra.mxu0 0
    %2465 = vmatprep.subr.bf16.mxu0 0
    %2466 = vmatpush1.bf16.xpose.msra.mxu0 0
    %2467 = vmatprep.subr.bf16.mxu0 0
    %2468 = vmatpush1.bf16.xpose.msra.mxu0 0
    %2469 = vmatprep.subr.bf16.mxu0 0
    %2470 = vmatpush1.bf16.xpose.msra.mxu0 %v2456
    %2471 = vmatprep.subr.bf16.mxu0 0
    %2472 = vmatpush1.bf16.xpose.msra.mxu0 %v2455
    %2473 = vmatprep.subr.bf16.mxu0 0
    %2474 = vmatpush2.bf16.xpose.msra.mxu0 0
    %2475 = vmatprep.subr.bf16.mxu0 0
    %2476 = vmatpush2.bf16.xpose.msra.mxu0 0
    %2477 = vmatprep.subr.bf16.mxu0 0
    %2478 = vmatpush2.bf16.xpose.msra.mxu0 0
    %2479 = vmatprep.subr.bf16.mxu0 0
    %2480 = vmatpush2.bf16.xpose.msra.mxu0 0
    %2481 = vmatprep.subr.bf16.mxu0 0
    %2482 = vmatpush2.bf16.xpose.msra.mxu0 0
    %2483 = vmatprep.subr.bf16.mxu0 0
    %2484 = vmatpush2.bf16.xpose.msra.mxu0 0
    %2485 = vmatprep.subr.bf16.mxu0 0
    %2486 = vmatpush2.bf16.xpose.msra.mxu0 0
    %2487 = vmatprep.subr.bf16.mxu0 0
    %2488 = vmatpush2.bf16.xpose.msra.mxu0 0
    %2489 = vmatprep.mubr.bf16.mxu0 0
    %2490 = vmatmul.mubr.bf16.gmra.mxu0 %v2454
    %v2491 = vpop.f32.mrf.mxu0
    %v2492 = vadd.f32 0.0, %v2491
    %v2493 = vpop.f32.mrf.mxu0
    %v2494 = vpop.f32.mrf.mxu0
    %v2495 = vpop.f32.mrf.mxu0
    %2496 = vdwg.mxu0
    %v2497 = vunpack.c.l.bf16 %v207
    %v2498 = vmul.f32 %v2492, %v2497
    %v2499 = vsub.f32 %v2492, %v2498
    %v2500 = vsub.f32 0.0, %v2498
    %v2501 = vmax.f32 %v2500, 0.0
    %v2502 = vand.u32 2147483647, %v2500
    %v2503 = vsub.f32 0.0, %v2502
    %v2504 = vmul.f32 %v2503, 1.442695
    %v2505 = vpow.pop %v2504
    %v2506 = vadd.f32 %v2505, 1.0
    %v2507 = vlog2.pop %v2506
    %v2508 = vmul.f32 %v2507, 0.6931472
    %v2509 = vmul.f32 -0.5, %v2505
    %v2510 = vadd.f32 %v2509, 1.0
    %v2511 = vmul.f32 %v2510, %v2505
    %v2512 = vand.u32 2147483647, %v2505
    %vm2513 = vcmp.lt.f32.partialorder %v2512, 0.0004427343
    %v2514 = vsel %vm2513, %v2511, %v2508
    %v2515 = vadd.f32 %v2501, %v2514
    %v2516 = vsub.f32 0.6931472, %v2515
    %vm2517 = vcmask 257024
    %v2518 = vsel %vm2517, %v2516, 0.0
    %2519 = vadd.xlane.f32.xlu0 %v2518
    %v2520 = vpop.xlane.xlu0 %2519
    %v2521 = vrot.slane %v2520, 4
    %v2522 = vadd.f32 %v2520, %v2521
    %v2523 = vrot.slane %v2522, 2
    %v2524 = vadd.f32 %v2522, %v2523
    %v2525 = vrot.slane %v2524, 1
    %v2526 = vadd.f32 %v2524, %v2525
    %s2527 = vtos %v2526
    %s2528 = smul.f32 %s2527, 0.03125
    %v2529 = vsub.f32 0.0, %v2499
    %v2530 = vmax.f32 %v2529, 0.0
    %v2531 = vand.u32 2147483647, %v2529
    %v2532 = vsub.f32 0.0, %v2531
    %v2533 = vmul.f32 %v2532, 1.442695
    %v2534 = vpow.pop %v2533
    %v2535 = vadd.f32 %v2534, 1.0
    %v2536 = vlog2.pop %v2535
    %v2537 = vmul.f32 %v2536, 0.6931472
    %v2538 = vmul.f32 -0.5, %v2534
    %v2539 = vadd.f32 %v2538, 1.0
    %v2540 = vmul.f32 %v2539, %v2534
    %v2541 = vand.u32 2147483647, %v2534
    %vm2542 = vcmp.lt.f32.partialorder %v2541, 0.0004427343
    %v2543 = vsel %vm2542, %v2540, %v2537
    %v2544 = vadd.f32 %v2530, %v2543
    %v2545 = vadd.f32 %v2544, %v2499
    %v2546 = vsub.f32 %v2545, 0.6931472
    %v2547 = vsel %vm2517, %v2546, 0.0
    %2548 = vadd.xlane.f32.xlu0 %v2547
    %v2549 = vpop.xlane.xlu0 %2548
    %v2550 = vrot.slane %v2549, 4
    %v2551 = vadd.f32 %v2549, %v2550
    %v2552 = vrot.slane %v2551, 2
    %v2553 = vadd.f32 %v2551, %v2552
    %v2554 = vrot.slane %v2553, 1
    %v2555 = vadd.f32 %v2553, %v2554
    %s2556 = vtos %v2555
    %s2557 = smul.f32 %s2556, 0.010416667
    %s2558 = ssub.f32 %s2557, %s2528
    %s2559 = scalar_lea.smem [#allocation20], 0
    %2560 = sst [smem:[%s2559]] %s2558
    // Predicated region
    $region106: #{tpu_custom_call.1} parent=1 // pred_check
      _
    $region107: #{tpu_custom_call.1} parent=1 // pred_check_branch
      %2562 = sbr.rel (0) target = $region109
    $region108: #{tpu_custom_call.1} parent=1 // pred_region
      %s2564 = ssub.s32 16, 16
      %2565 = vsyncadd [#allocation4], %s2564
      %2568 = dma.smem_to_hbm [#allocation20], 16, %s15, [#allocation4]
    $region109: #{tpu_custom_call.1} parent=1 // pred_fallthru
      _
    // Predicated region
    $region110: #{tpu_custom_call.1} parent=1 // pred_check
      _
    $region111: #{tpu_custom_call.1} parent=1 // pred_check_branch
      %2570 = sbr.rel (0) target = $region113
    $region112: #{tpu_custom_call.1} parent=1 // pred_region
      %2571 = dma.done [#allocation4], 16
    $region113: #{tpu_custom_call.1} parent=1 // pred_fallthru
      _
    %2572 = sfence
    %2573 = vsyncpa [#allocation3], 1
    %2574 = vsyncpa [#allocation6], 1
    %2575 = vsyncpa [#allocation9], 1
    %2576 = vsyncpa [#allocation12], 1
    %2577 = vsyncpa [#allocation15], 1
    %2578 = vsyncpa [#allocation18], 1
    %2579 = vsyncpa [#allocation4], 1

</llo_original>
